<compile_context>
chip_gen: v5e
topology: v5e:2x2
jax: 0.10.0
libtpu: 0.0.40
codegen_flags: <defaults>
</compile_context>

<pallas_src>
import functools

import jax
import jax.numpy as jnp
from jax.experimental import pallas as pl
from jax.experimental.pallas import tpu as pltpu


# --------------------------------------------------------------------------- #
# Tiling / compiler-param helpers
# --------------------------------------------------------------------------- #
def _row_tile(m):
    """Largest row tile dividing m (512 preferred on v5e/v6e); full-M fallback."""
    for t in (512, 256, 128, 8):
        if m % t == 0:
            return t
    return m


def _col_tile(n):
    """Output-column tile for linear(); keeps per-step VMEM bounded on v7x."""
    if n <= 2048:
        return n
    for t in (1536, 1152, 1024, 768, 512, 384, 256, 128):
        if n % t == 0:
            return t
    return n


def _q_tile(s):
    """Query-row tile inside attention (bounds the live (tq, S) score slab)."""
    for t in (256, 128):
        if s % t == 0:
            return t
    return s


def _head_grouping(n_heads, head_dim):
    """Smallest head group whose lane width is a multiple of 128; else all heads."""
    for g in range(1, n_heads + 1):
        if n_heads % g == 0 and (g * head_dim) % 128 == 0:
            return g, n_heads // g
    return n_heads, 1


@functools.lru_cache(maxsize=None)
def _vmem_limit_bytes():
    # 3/4 of physical VMEM, capped at 64 MiB (v7x has 64 MiB; v5e/v6e have 128).
    try:
        cap = pltpu.get_tpu_info().vmem_capacity_bytes
        return min(int(cap * 3 // 4), 64 * 1024 * 1024)
    except Exception:  # pragma: no cover - fall back to compiler default
        return None


def _cparams(dims):
    return pltpu.CompilerParams(dimension_semantics=dims,
                                vmem_limit_bytes=_vmem_limit_bytes())


# --------------------------------------------------------------------------- #
# Pallas kernels
# --------------------------------------------------------------------------- #
def _linear_kernel(x_ref, w_ref, b_ref, o_ref, *, activation):
    # bf16 operands on the MXU, f32 accumulation; bias/activation in f32.
    x = x_ref[...]
    if x.dtype != jnp.bfloat16:
        x = x.astype(jnp.bfloat16)
    y = jnp.dot(x, w_ref[...], preferred_element_type=jnp.float32)
    y = y + b_ref[...].astype(jnp.float32)
    if activation == "gelu":
        # tanh-approx GELU (see TODO at top).
        y = 0.5 * y * (1.0 + jnp.tanh(0.7978845608028654
                                      * (y + 0.044715 * y * y * y)))
    elif activation == "tanh":
        y = jnp.tanh(y)
    o_ref[...] = y.astype(o_ref.dtype)


def linear(x, w, b, activation=None, out_dtype=jnp.bfloat16):
    """x: (M, K) bf16, w: (K, N) bf16 (pre-cast), b: (N,) f32 -> (M, N)."""
    M, K = x.shape
    N = w.shape[1]
    tm = _row_tile(M)
    tn = _col_tile(N)
    return pl.pallas_call(
        functools.partial(_linear_kernel, activation=activation),
        out_shape=jax.ShapeDtypeStruct((M, N), out_dtype),
        grid=(M // tm, N // tn),
        in_specs=[
            pl.BlockSpec((tm, K), lambda i, j: (i, 0)),
            pl.BlockSpec((K, tn), lambda i, j: (0, j)),
            pl.BlockSpec((1, tn), lambda i, j: (0, j)),
        ],
        out_specs=pl.BlockSpec((tm, tn), lambda i, j: (i, j)),
        compiler_params=_cparams(("parallel", "parallel")),
    )(x, w, b.reshape(1, N))


def _ln_math(x, g, b, eps):
    mu = jnp.mean(x, axis=-1, keepdims=True)
    var = jnp.mean((x - mu) ** 2, axis=-1, keepdims=True)
    return (x - mu) * jax.lax.rsqrt(var + eps) * g + b


def _layernorm_kernel(x_ref, g_ref, b_ref, o_ref, *, eps):
    x = x_ref[...].astype(jnp.float32)
    o_ref[...] = _ln_math(x, g_ref[...], b_ref[...], eps).astype(o_ref.dtype)


def layernorm(x, g, b, eps=1e-12, out_dtype=jnp.bfloat16):
    """x: (M, H) -> (M, H) out_dtype (stats in f32)."""
    M, H = x.shape
    tm = _row_tile(M)
    return pl.pallas_call(
        functools.partial(_layernorm_kernel, eps=eps),
        out_shape=jax.ShapeDtypeStruct((M, H), out_dtype),
        grid=(M // tm,),
        in_specs=[
            pl.BlockSpec((tm, H), lambda i: (i, 0)),
            pl.BlockSpec((1, H), lambda i: (0, 0)),
            pl.BlockSpec((1, H), lambda i: (0, 0)),
        ],
        out_specs=pl.BlockSpec((tm, H), lambda i: (i, 0)),
        compiler_params=_cparams(("parallel",)),
    )(x, g.reshape(1, H), b.reshape(1, H))


def _linear_residual_ln_kernel(x_ref, w_ref, b_ref, r_ref, g_ref, beta_ref,
                               o_ref, *, eps):
    # Fused: y = LayerNorm(x @ w + b + residual).  Matmul in bf16, rest in f32.
    x = x_ref[...]
    if x.dtype != jnp.bfloat16:
        x = x.astype(jnp.bfloat16)
    y = jnp.dot(x, w_ref[...], preferred_element_type=jnp.float32)
    y = y + b_ref[...].astype(jnp.float32) + r_ref[...].astype(jnp.float32)
    o_ref[...] = _ln_math(y, g_ref[...], beta_ref[...], eps).astype(o_ref.dtype)


def linear_residual_layernorm(x, w, b, resid, gamma, beta, eps=1e-12):
    """LayerNorm(x @ w + b + resid); x: (M, K), w: (K, N), resid: (M, N)."""
    M, K = x.shape
    N = w.shape[1]
    tm = _row_tile(M)
    return pl.pallas_call(
        functools.partial(_linear_residual_ln_kernel, eps=eps),
        out_shape=jax.ShapeDtypeStruct((M, N), jnp.bfloat16),
        grid=(M // tm,),
        in_specs=[
            pl.BlockSpec((tm, K), lambda i: (i, 0)),
            pl.BlockSpec((K, N), lambda i: (0, 0)),
            pl.BlockSpec((1, N), lambda i: (0, 0)),
            pl.BlockSpec((tm, N), lambda i: (i, 0)),
            pl.BlockSpec((1, N), lambda i: (0, 0)),
            pl.BlockSpec((1, N), lambda i: (0, 0)),
        ],
        out_specs=pl.BlockSpec((tm, N), lambda i: (i, 0)),
        compiler_params=_cparams(("parallel",)),
    )(x, w, b.reshape(1, N), resid, gamma.reshape(1, N), beta.reshape(1, N))


def _attention_kernel(qkv_ref, m_ref, o_ref, *, heads_per_group, head_dim, q_tile):
    # One (batch, head-group) pair per grid step.  The fused QKV slab is laid out
    # per group as [Q_g | K_g | V_g] (see prepare_params), so all slices below
    # are static and (for BERT-base shapes) 128-lane aligned.
    gw = heads_per_group * head_dim
    qkv = qkv_ref[0]                                  # (S, 3*gw) bf16
    S = qkv.shape[0]
    mask = m_ref[0].astype(jnp.float32)               # (1, S) additive key mask
    k = qkv[:, gw:2 * gw]
    v = qkv[:, 2 * gw:3 * gw]

    for h in range(heads_per_group):                  # small static unroll (<=2 for BERT-base)
        kh = k[:, h * head_dim:(h + 1) * head_dim]    # (S, Dh)
        vh = v[:, h * head_dim:(h + 1) * head_dim]
        for t in range(S // q_tile):                  # query tiling bounds live scores
            qh = qkv[t * q_tile:(t + 1) * q_tile,
                     h * head_dim:(h + 1) * head_dim]  # (tq, Dh); scale pre-folded
            s = jax.lax.dot_general(qh, kh, (((1,), (1,)), ((), ())),
                                    preferred_element_type=jnp.float32)
            s = s + mask
            s = s - jnp.max(s, axis=-1, keepdims=True)
            p = jnp.exp(s)
            p = p * pl.reciprocal(jnp.sum(p, axis=-1, keepdims=True), approx=True)
            ctx = jax.lax.dot_general(p.astype(vh.dtype), vh,
                                      (((1,), (0,)), ((), ())),
                                      preferred_element_type=jnp.float32)
            # Direct store into this head's output slice (no concat, no long live ranges).
            o_ref[0, t * q_tile:(t + 1) * q_tile,
                  h * head_dim:(h + 1) * head_dim] = ctx.astype(o_ref.dtype)


def attention(qkv_grouped, add_mask, n_heads, head_dim):
    """qkv_grouped: (B, S, 3H) bf16 in head-group layout; add_mask: (B, 1, S).

    Returns (B, S, H) bf16 context (heads concatenated in original order)."""
    B, S, H3 = qkv_grouped.shape
    H = H3 // 3
    heads_per_group, n_groups = _head_grouping(n_heads, head_dim)
    gw = heads_per_group * head_dim
    return pl.pallas_call(
        functools.partial(_attention_kernel, heads_per_group=heads_per_group,
                          head_dim=head_dim, q_tile=_q_tile(S)),
        out_shape=jax.ShapeDtypeStruct((B, S, H), jnp.bfloat16),
        grid=(B, n_groups),
        in_specs=[
            pl.BlockSpec((1, S, 3 * gw), lambda b, g: (b, 0, g)),
            pl.BlockSpec((1, 1, S), lambda b, g: (b, 0, 0)),
        ],
        out_specs=pl.BlockSpec((1, S, gw), lambda b, g: (b, 0, g)),
        compiler_params=_cparams(("parallel", "parallel")),
    )(qkv_grouped, add_mask)


# --------------------------------------------------------------------------- #
# Model (glue in plain JAX, compute in Pallas kernels above)
# --------------------------------------------------------------------------- #
def encoder_layer(x, add_mask, p, cfg):
    B, S, H = x.shape
    n_heads = cfg["heads"]
    head_dim = H // n_heads
    x2 = x.reshape(B * S, H)                                        # bf16

    # Fused Q|K|V projection (weights pre-concatenated, scale pre-folded, bf16).
    qkv = linear(x2, p["w_qkv"], p["b_qkv"]).reshape(B, S, 3 * H)   # bf16

    ctx = attention(qkv, add_mask, n_heads, head_dim).reshape(B * S, H)

    # Output projection + residual + LayerNorm fused in one pallas_call.
    x2 = linear_residual_layernorm(ctx, p["wo"], p["bo"], x2,
                                   p["ln1_g"], p["ln1_b"])

    ff = linear(x2, p["w1"], p["b1"], activation="gelu")            # bf16
    # Second FFN matmul + residual + LayerNorm fused.
    x2 = linear_residual_layernorm(ff, p["w2"], p["b2"], x2,
                                   p["ln2_g"], p["ln2_b"])
    return x2.reshape(B, S, H)


def bert_sentiment_forward(params, input_ids, attention_mask, cfg):
    B, S = input_ids.shape
    H = cfg["hidden"]

    # Embeddings (gather is plain-JAX glue) + LayerNorm (Pallas, bf16 out).
    x = (params["word_emb"][input_ids]
         + params["pos_emb"][:S][None, :, :]
         + params["type_emb"][0][None, None, :])                    # token_type_ids == 0
    x = layernorm(x.reshape(B * S, H),
                  params["emb_ln_g"], params["emb_ln_b"]).reshape(B, S, H)

    # Additive attention mask: 0 for real tokens, -1e9 for padding.
    add_mask = ((1.0 - attention_mask.astype(jnp.float32)) * -1e9).reshape(B, 1, S)

    for layer in params["layers"]:
        x = encoder_layer(x, add_mask, layer, cfg)

    # Pooler + classifier: negligible FLOPs, degenerate tiles (M=B, N=n_classes)
    # -> run in plain JAX to avoid lane-sparse stores / per-call Pallas overhead.
    cls = x[:, 0, :].astype(jnp.float32)
    pooled = jnp.tanh(cls @ params["pooler_w"] + params["pooler_b"])
    # Dropout(p=0.3) -> identity at inference (see TODO at top), then classifier.
    logits = pooled @ params["out_w"] + params["out_b"]
    return logits


# --------------------------------------------------------------------------- #
# Parameters
# --------------------------------------------------------------------------- #
def init_params(key, cfg):
    H, I = cfg["hidden"], cfg["intermediate"]
    keys = jax.random.split(key, 8 + cfg["layers"] * 16)
    it = iter(keys)

    def nrm(shape):
        return jax.random.normal(next(it), shape, jnp.float32) * 0.02

    params = dict(
        word_emb=nrm((cfg["vocab"], H)),
        pos_emb=nrm((cfg["max_pos"], H)),
        type_emb=nrm((cfg["type_vocab"], H)),
        emb_ln_g=jnp.ones((H,), jnp.float32),
        emb_ln_b=jnp.zeros((H,), jnp.float32),
        pooler_w=nrm((H, H)),
        pooler_b=jnp.zeros((H,), jnp.float32),
        out_w=nrm((H, cfg["n_classes"])),
        out_b=jnp.zeros((cfg["n_classes"],), jnp.float32),
        layers=[],
    )
    for _ in range(cfg["layers"]):
        params["layers"].append(dict(
            wq=nrm((H, H)), bq=jnp.zeros((H,), jnp.float32),
            wk=nrm((H, H)), bk=jnp.zeros((H,), jnp.float32),
            wv=nrm((H, H)), bv=jnp.zeros((H,), jnp.float32),
            wo=nrm((H, H)), bo=jnp.zeros((H,), jnp.float32),
            ln1_g=jnp.ones((H,), jnp.float32), ln1_b=jnp.zeros((H,), jnp.float32),
            w1=nrm((H, I)), b1=jnp.zeros((I,), jnp.float32),
            w2=nrm((I, H)), b2=jnp.zeros((H,), jnp.float32),
            ln2_g=jnp.ones((H,), jnp.float32), ln2_b=jnp.zeros((H,), jnp.float32),
        ))
    return params


def prepare_params(params, cfg):
    """One-time inference prep: concat QKV weights in head-group-interleaved
    order, fold the 1/sqrt(Dh) attention scale into the Q columns, and cast all
    matmul weights to bf16 (so forward passes never re-concat or re-cast)."""
    H = cfg["hidden"]
    n_heads = cfg["heads"]
    head_dim = H // n_heads
    heads_per_group, n_groups = _head_grouping(n_heads, head_dim)
    gw = heads_per_group * head_dim
    scale = 1.0 / (head_dim ** 0.5)

    prep = dict(
        word_emb=params["word_emb"],
        pos_emb=params["pos_emb"],
        type_emb=params["type_emb"],
        emb_ln_g=params["emb_ln_g"], emb_ln_b=params["emb_ln_b"],
        pooler_w=params["pooler_w"], pooler_b=params["pooler_b"],
        out_w=params["out_w"], out_b=params["out_b"],
        layers=[],
    )
    for lp in params["layers"]:
        w_parts, b_parts = [], []
        for g in range(n_groups):
            s, e = g * gw, (g + 1) * gw
            w_parts += [lp["wq"][:, s:e] * scale, lp["wk"][:, s:e], lp["wv"][:, s:e]]
            b_parts += [lp["bq"][s:e] * scale, lp["bk"][s:e], lp["bv"][s:e]]
        prep["layers"].append(dict(
            w_qkv=jnp.concatenate(w_parts, axis=1).astype(jnp.bfloat16),   # (H, 3H)
            b_qkv=jnp.concatenate(b_parts, axis=0).astype(jnp.float32),    # (3H,)
            wo=lp["wo"].astype(jnp.bfloat16), bo=lp["bo"],
            ln1_g=lp["ln1_g"], ln1_b=lp["ln1_b"],
            w1=lp["w1"].astype(jnp.bfloat16), b1=lp["b1"],
            w2=lp["w2"].astype(jnp.bfloat16), b2=lp["b2"],
            ln2_g=lp["ln2_g"], ln2_b=lp["ln2_b"],
        ))
    return prep


if __name__ == "__main__":
    cfg = dict(vocab=100, hidden=32, layers=2, heads=4, intermediate=64,
               max_pos=16, type_vocab=2, n_classes=3)

    key = jax.random.PRNGKey(0)
    pkey, dkey = jax.random.split(key)
    params = prepare_params(init_params(pkey, cfg), cfg)

    B, S = 2, 8
    input_ids = jax.random.randint(dkey, (B, S), 0, cfg["vocab"], dtype=jnp.int32)
    attention_mask = jnp.array([[1, 1, 1, 1, 1, 1, 1, 1],
                                [1, 1, 1, 1, 1, 1, 0, 0]], dtype=jnp.int32)

    fwd = jax.jit(functools.partial(bert_sentiment_forward, cfg=cfg))
    logits = fwd(params, input_ids, attention_mask)
    logits = jax.block_until_ready(logits)

    assert logits.shape == (B, cfg["n_classes"])
    assert bool(jnp.all(jnp.isfinite(logits)))
    print("KERNEL_OK")
</pallas_src>

<mosaic_0001>
module attributes {stable_mosaic.version = 11 : i64} {
  func.func @_layernorm_kernel(%arg0: i32, %arg1: memref<8x32xf32, #tpu.memory_space<vmem>>, %arg2: memref<1x32xf32, #tpu.memory_space<vmem>>, %arg3: memref<1x32xf32, #tpu.memory_space<vmem>>, %arg4: memref<8x32xbf16, #tpu.memory_space<vmem>>) attributes {dimension_semantics = [#tpu.dimension_semantics<parallel>], iteration_bounds = array<i64: 2>, scalar_prefetch = 0 : i64, scratch_operands = 0 : i64, tpu.core_type = #tpu.core_type<tc>, window_params = [{transform_indices = @transform_0, window_bounds = array<i64: 8, 32>}, {pipeline_mode = #tpu.pipeline_mode<synchronous>, transform_indices = @transform_1, window_bounds = array<i64: 1, 32>}, {pipeline_mode = #tpu.pipeline_mode<synchronous>, transform_indices = @transform_2, window_bounds = array<i64: 1, 32>}, {transform_indices = @transform_3, window_bounds = array<i64: 8, 32>}]} {
    %c0 = arith.constant 0 : index
    %c0_0 = arith.constant 0 : index
    %0 = vector.load %arg1[%c0, %c0_0] : memref<8x32xf32, #tpu.memory_space<vmem>>, vector<8x32xf32>
    %c0_1 = arith.constant 0 : index
    %c0_2 = arith.constant 0 : index
    %1 = vector.load %arg2[%c0_1, %c0_2] : memref<1x32xf32, #tpu.memory_space<vmem>>, vector<1x32xf32>
    %c0_3 = arith.constant 0 : index
    %c0_4 = arith.constant 0 : index
    %2 = vector.load %arg3[%c0_3, %c0_4] : memref<1x32xf32, #tpu.memory_space<vmem>>, vector<1x32xf32>
    %cst = arith.constant dense<0.000000e+00> : vector<8xf32>
    %3 = vector.multi_reduction <add>, %0, %cst [1] : vector<8x32xf32> to vector<8xf32>
    %4 = vector.shape_cast %3 : vector<8xf32> to vector<8x1xf32>
    %cst_5 = arith.constant 3.200000e+01 : f32
    %5 = vector.broadcast %cst_5 : f32 to vector<8x1xf32>
    %6 = arith.divf %4, %5 : vector<8x1xf32>
    %7 = vector.broadcast %6 : vector<8x1xf32> to vector<8x32xf32>
    %8 = arith.subf %0, %7 : vector<8x32xf32>
    %9 = arith.mulf %8, %8 : vector<8x32xf32>
    %cst_6 = arith.constant dense<0.000000e+00> : vector<8xf32>
    %10 = vector.multi_reduction <add>, %9, %cst_6 [1] : vector<8x32xf32> to vector<8xf32>
    %11 = vector.shape_cast %10 : vector<8xf32> to vector<8x1xf32>
    %cst_7 = arith.constant 3.200000e+01 : f32
    %12 = vector.broadcast %cst_7 : f32 to vector<8x1xf32>
    %13 = arith.divf %11, %12 : vector<8x1xf32>
    %14 = vector.broadcast %6 : vector<8x1xf32> to vector<8x32xf32>
    %15 = arith.subf %0, %14 : vector<8x32xf32>
    %cst_8 = arith.constant 9.99999996E-13 : f32
    %16 = vector.broadcast %cst_8 : f32 to vector<8x1xf32>
    %17 = arith.addf %13, %16 : vector<8x1xf32>
    %18 = math.rsqrt %17 : vector<8x1xf32>
    %19 = vector.broadcast %18 : vector<8x1xf32> to vector<8x32xf32>
    %20 = arith.mulf %15, %19 : vector<8x32xf32>
    %21 = vector.broadcast %1 : vector<1x32xf32> to vector<8x32xf32>
    %22 = arith.mulf %20, %21 : vector<8x32xf32>
    %23 = vector.broadcast %2 : vector<1x32xf32> to vector<8x32xf32>
    %24 = arith.addf %22, %23 : vector<8x32xf32>
    %25 = arith.truncf %24 : vector<8x32xf32> to vector<8x32xbf16>
    %c0_9 = arith.constant 0 : index
    %c0_10 = arith.constant 0 : index
    %26 = vector.load %arg4[%c0_9, %c0_10] : memref<8x32xbf16, #tpu.memory_space<vmem>>, vector<8x32xbf16>
    tpu.vector_store %arg4[%c0_9, %c0_10], %25 {strides = array<i32>} : memref<8x32xbf16, #tpu.memory_space<vmem>>, vector<8x32xbf16>,
    return
  }
  func.func @transform_0(%arg0: i32) -> (i32, i32) {
    %c0_i32 = arith.constant 0 : i32
    %c0_i32_0 = arith.constant 0 : i32
    return %arg0, %c0_i32 : i32, i32
  }
  func.func @transform_1(%arg0: i32) -> (i32, i32) {
    %c0_i32 = arith.constant 0 : i32
    %c0_i32_0 = arith.constant 0 : i32
    %c0_i32_1 = arith.constant 0 : i32
    return %c0_i32, %c0_i32_0 : i32, i32
  }
  func.func @transform_2(%arg0: i32) -> (i32, i32) {
    %c0_i32 = arith.constant 0 : i32
    %c0_i32_0 = arith.constant 0 : i32
    %c0_i32_1 = arith.constant 0 : i32
    return %c0_i32, %c0_i32_0 : i32, i32
  }
  func.func @transform_3(%arg0: i32) -> (i32, i32) {
    %c0_i32 = arith.constant 0 : i32
    %c0_i32_0 = arith.constant 0 : i32
    return %arg0, %c0_i32 : i32, i32
  }
}

module attributes {stable_mosaic.version = 11 : i64} {
  func.func @_linear_kernel(%arg0: i32, %arg1: i32, %arg2: memref<8x32xbf16, #tpu.memory_space<vmem>>, %arg3: memref<32x96xbf16, #tpu.memory_space<vmem>>, %arg4: memref<1x96xf32, #tpu.memory_space<vmem>>, %arg5: memref<8x96xbf16, #tpu.memory_space<vmem>>) attributes {dimension_semantics = [#tpu.dimension_semantics<parallel>, #tpu.dimension_semantics<parallel>], iteration_bounds = array<i64: 2, 1>, scalar_prefetch = 0 : i64, scratch_operands = 0 : i64, tpu.core_type = #tpu.core_type<tc>, window_params = [{transform_indices = @transform_0, window_bounds = array<i64: 8, 32>}, {transform_indices = @transform_1, window_bounds = array<i64: 32, 96>}, {transform_indices = @transform_2, window_bounds = array<i64: 1, 96>}, {transform_indices = @transform_3, window_bounds = array<i64: 8, 96>}]} {
    %c0 = arith.constant 0 : index
    %c0_0 = arith.constant 0 : index
    %0 = vector.load %arg2[%c0, %c0_0] : memref<8x32xbf16, #tpu.memory_space<vmem>>, vector<8x32xbf16>
    %c0_1 = arith.constant 0 : index
    %c0_2 = arith.constant 0 : index
    %1 = vector.load %arg3[%c0_1, %c0_2] : memref<32x96xbf16, #tpu.memory_space<vmem>>, vector<32x96xbf16>
    %cst = arith.constant dense<0.000000e+00> : vector<8x96xf32>
    %2 = tpu.matmul %0, %1, %cst {dimension_numbers = #tpu.dot_dimension_numbers<[1], [0], [0], [1], [0, 0, 1, 1], [], []>} : vector<8x32xbf16>, vector<32x96xbf16>, vector<8x96xf32> -> vector<8x96xf32>
    %c0_3 = arith.constant 0 : index
    %c0_4 = arith.constant 0 : index
    %3 = vector.load %arg4[%c0_3, %c0_4] : memref<1x96xf32, #tpu.memory_space<vmem>>, vector<1x96xf32>
    %4 = vector.broadcast %3 : vector<1x96xf32> to vector<8x96xf32>
    %5 = arith.addf %2, %4 : vector<8x96xf32>
    %6 = arith.truncf %5 : vector<8x96xf32> to vector<8x96xbf16>
    %c0_5 = arith.constant 0 : index
    %c0_6 = arith.constant 0 : index
    %7 = vector.load %arg5[%c0_5, %c0_6] : memref<8x96xbf16, #tpu.memory_space<vmem>>, vector<8x96xbf16>
    tpu.vector_store %arg5[%c0_5, %c0_6], %6 {strides = array<i32>} : memref<8x96xbf16, #tpu.memory_space<vmem>>, vector<8x96xbf16>,
    return
  }
  func.func @transform_0(%arg0: i32, %arg1: i32) -> (i32, i32) {
    %c0_i32 = arith.constant 0 : i32
    %c0_i32_0 = arith.constant 0 : i32
    return %arg0, %c0_i32 : i32, i32
  }
  func.func @transform_1(%arg0: i32, %arg1: i32) -> (i32, i32) {
    %c0_i32 = arith.constant 0 : i32
    %c0_i32_0 = arith.constant 0 : i32
    return %c0_i32, %arg1 : i32, i32
  }
  func.func @transform_2(%arg0: i32, %arg1: i32) -> (i32, i32) {
    %c0_i32 = arith.constant 0 : i32
    %c0_i32_0 = arith.constant 0 : i32
    return %c0_i32, %arg1 : i32, i32
  }
  func.func @transform_3(%arg0: i32, %arg1: i32) -> (i32, i32) {
    %c0_i32 = arith.constant 0 : i32
    return %arg0, %arg1 : i32, i32
  }
}

module attributes {stable_mosaic.version = 11 : i64} {
  func.func @_linear_residual_ln_kernel(%arg0: i32, %arg1: memref<8x32xbf16, #tpu.memory_space<vmem>>, %arg2: memref<32x32xbf16, #tpu.memory_space<vmem>>, %arg3: memref<1x32xf32, #tpu.memory_space<vmem>>, %arg4: memref<8x32xbf16, #tpu.memory_space<vmem>>, %arg5: memref<1x32xf32, #tpu.memory_space<vmem>>, %arg6: memref<1x32xf32, #tpu.memory_space<vmem>>, %arg7: memref<8x32xbf16, #tpu.memory_space<vmem>>) attributes {dimension_semantics = [#tpu.dimension_semantics<parallel>], iteration_bounds = array<i64: 2>, scalar_prefetch = 0 : i64, scratch_operands = 0 : i64, tpu.core_type = #tpu.core_type<tc>, window_params = [{transform_indices = @transform_0, window_bounds = array<i64: 8, 32>}, {pipeline_mode = #tpu.pipeline_mode<synchronous>, transform_indices = @transform_1, window_bounds = array<i64: 32, 32>}, {pipeline_mode = #tpu.pipeline_mode<synchronous>, transform_indices = @transform_2, window_bounds = array<i64: 1, 32>}, {transform_indices = @transform_3, window_bounds = array<i64: 8, 32>}, {pipeline_mode = #tpu.pipeline_mode<synchronous>, transform_indices = @transform_4, window_bounds = array<i64: 1, 32>}, {pipeline_mode = #tpu.pipeline_mode<synchronous>, transform_indices = @transform_5, window_bounds = array<i64: 1, 32>}, {transform_indices = @transform_6, window_bounds = array<i64: 8, 32>}]} {
    %c0 = arith.constant 0 : index
    %c0_0 = arith.constant 0 : index
    %0 = vector.load %arg1[%c0, %c0_0] : memref<8x32xbf16, #tpu.memory_space<vmem>>, vector<8x32xbf16>
    %c0_1 = arith.constant 0 : index
    %c0_2 = arith.constant 0 : index
    %1 = vector.load %arg2[%c0_1, %c0_2] : memref<32x32xbf16, #tpu.memory_space<vmem>>, vector<32x32xbf16>
    %cst = arith.constant dense<0.000000e+00> : vector<8x32xf32>
    %2 = tpu.matmul %0, %1, %cst {dimension_numbers = #tpu.dot_dimension_numbers<[1], [0], [0], [1], [0, 0, 1, 1], [], []>} : vector<8x32xbf16>, vector<32x32xbf16>, vector<8x32xf32> -> vector<8x32xf32>
    %c0_3 = arith.constant 0 : index
    %c0_4 = arith.constant 0 : index
    %3 = vector.load %arg3[%c0_3, %c0_4] : memref<1x32xf32, #tpu.memory_space<vmem>>, vector<1x32xf32>
    %4 = vector.broadcast %3 : vector<1x32xf32> to vector<8x32xf32>
    %5 = arith.addf %2, %4 : vector<8x32xf32>
    %c0_5 = arith.constant 0 : index
    %c0_6 = arith.constant 0 : index
    %6 = vector.load %arg4[%c0_5, %c0_6] : memref<8x32xbf16, #tpu.memory_space<vmem>>, vector<8x32xbf16>
    %7 = arith.extf %6 : vector<8x32xbf16> to vector<8x32xf32>
    %8 = arith.addf %5, %7 : vector<8x32xf32>
    %c0_7 = arith.constant 0 : index
    %c0_8 = arith.constant 0 : index
    %9 = vector.load %arg5[%c0_7, %c0_8] : memref<1x32xf32, #tpu.memory_space<vmem>>, vector<1x32xf32>
    %c0_9 = arith.constant 0 : index
    %c0_10 = arith.constant 0 : index
    %10 = vector.load %arg6[%c0_9, %c0_10] : memref<1x32xf32, #tpu.memory_space<vmem>>, vector<1x32xf32>
    %cst_11 = arith.constant dense<0.000000e+00> : vector<8xf32>
    %11 = vector.multi_reduction <add>, %8, %cst_11 [1] : vector<8x32xf32> to vector<8xf32>
    %12 = vector.shape_cast %11 : vector<8xf32> to vector<8x1xf32>
    %cst_12 = arith.constant 3.200000e+01 : f32
    %13 = vector.broadcast %cst_12 : f32 to vector<8x1xf32>
    %14 = arith.divf %12, %13 : vector<8x1xf32>
    %15 = vector.broadcast %14 : vector<8x1xf32> to vector<8x32xf32>
    %16 = arith.subf %8, %15 : vector<8x32xf32>
    %17 = arith.mulf %16, %16 : vector<8x32xf32>
    %cst_13 = arith.constant dense<0.000000e+00> : vector<8xf32>
    %18 = vector.multi_reduction <add>, %17, %cst_13 [1] : vector<8x32xf32> to vector<8xf32>
    %19 = vector.shape_cast %18 : vector<8xf32> to vector<8x1xf32>
    %cst_14 = arith.constant 3.200000e+01 : f32
    %20 = vector.broadcast %cst_14 : f32 to vector<8x1xf32>
    %21 = arith.divf %19, %20 : vector<8x1xf32>
    %22 = vector.broadcast %14 : vector<8x1xf32> to vector<8x32xf32>
    %23 = arith.subf %8, %22 : vector<8x32xf32>
    %cst_15 = arith.constant 9.99999996E-13 : f32
    %24 = vector.broadcast %cst_15 : f32 to vector<8x1xf32>
    %25 = arith.addf %21, %24 : vector<8x1xf32>
    %26 = math.rsqrt %25 : vector<8x1xf32>
    %27 = vector.broadcast %26 : vector<8x1xf32> to vector<8x32xf32>
    %28 = arith.mulf %23, %27 : vector<8x32xf32>
    %29 = vector.broadcast %9 : vector<1x32xf32> to vector<8x32xf32>
    %30 = arith.mulf %28, %29 : vector<8x32xf32>
    %31 = vector.broadcast %10 : vector<1x32xf32> to vector<8x32xf32>
    %32 = arith.addf %30, %31 : vector<8x32xf32>
    %33 = arith.truncf %32 : vector<8x32xf32> to vector<8x32xbf16>
    %c0_16 = arith.constant 0 : index
    %c0_17 = arith.constant 0 : index
    %34 = vector.load %arg7[%c0_16, %c0_17] : memref<8x32xbf16, #tpu.memory_space<vmem>>, vector<8x32xbf16>
    tpu.vector_store %arg7[%c0_16, %c0_17], %33 {strides = array<i32>} : memref<8x32xbf16, #tpu.memory_space<vmem>>, vector<8x32xbf16>,
    return
  }
  func.func @transform_0(%arg0: i32) -> (i32, i32) {
    %c0_i32 = arith.constant 0 : i32
    %c0_i32_0 = arith.constant 0 : i32
    return %arg0, %c0_i32 : i32, i32
  }
  func.func @transform_1(%arg0: i32) -> (i32, i32) {
    %c0_i32 = arith.constant 0 : i32
    %c0_i32_0 = arith.constant 0 : i32
    %c0_i32_1 = arith.constant 0 : i32
    return %c0_i32, %c0_i32_0 : i32, i32
  }
  func.func @transform_2(%arg0: i32) -> (i32, i32) {
    %c0_i32 = arith.constant 0 : i32
    %c0_i32_0 = arith.constant 0 : i32
    %c0_i32_1 = arith.constant 0 : i32
    return %c0_i32, %c0_i32_0 : i32, i32
  }
  func.func @transform_3(%arg0: i32) -> (i32, i32) {
    %c0_i32 = arith.constant 0 : i32
    %c0_i32_0 = arith.constant 0 : i32
    return %arg0, %c0_i32 : i32, i32
  }
  func.func @transform_4(%arg0: i32) -> (i32, i32) {
    %c0_i32 = arith.constant 0 : i32
    %c0_i32_0 = arith.constant 0 : i32
    %c0_i32_1 = arith.constant 0 : i32
    return %c0_i32, %c0_i32_0 : i32, i32
  }
  func.func @transform_5(%arg0: i32) -> (i32, i32) {
    %c0_i32 = arith.constant 0 : i32
    %c0_i32_0 = arith.constant 0 : i32
    %c0_i32_1 = arith.constant 0 : i32
    return %c0_i32, %c0_i32_0 : i32, i32
  }
  func.func @transform_6(%arg0: i32) -> (i32, i32) {
    %c0_i32 = arith.constant 0 : i32
    %c0_i32_0 = arith.constant 0 : i32
    return %arg0, %c0_i32 : i32, i32
  }
}

module attributes {stable_mosaic.version = 11 : i64} {
  func.func @_attention_kernel(%arg0: i32, %arg1: i32, %arg2: memref<1x8x96xbf16, #tpu.memory_space<vmem>>, %arg3: memref<1x1x8xf32, #tpu.memory_space<vmem>>, %arg4: memref<1x8x32xbf16, #tpu.memory_space<vmem>>) attributes {dimension_semantics = [#tpu.dimension_semantics<parallel>, #tpu.dimension_semantics<parallel>], iteration_bounds = array<i64: 2, 1>, scalar_prefetch = 0 : i64, scratch_operands = 0 : i64, tpu.core_type = #tpu.core_type<tc>, window_params = [{transform_indices = @transform_0, window_bounds = array<i64: 1, 8, 96>}, {transform_indices = @transform_1, window_bounds = array<i64: 1, 1, 8>}, {transform_indices = @transform_2, window_bounds = array<i64: 1, 8, 32>}]} {
    %c0 = arith.constant 0 : index
    %c0_0 = arith.constant 0 : index
    %c0_1 = arith.constant 0 : index
    %0 = vector.load %arg2[%c0, %c0_0, %c0_1] : memref<1x8x96xbf16, #tpu.memory_space<vmem>>, vector<1x8x96xbf16>
    %1 = vector.shape_cast %0 : vector<1x8x96xbf16> to vector<8x96xbf16>
    %c0_2 = arith.constant 0 : index
    %c0_3 = arith.constant 0 : index
    %c0_4 = arith.constant 0 : index
    %2 = vector.load %arg3[%c0_2, %c0_3, %c0_4] : memref<1x1x8xf32, #tpu.memory_space<vmem>>, vector<1x1x8xf32>
    %3 = vector.shape_cast %2 : vector<1x1x8xf32> to vector<1x8xf32>
    %4 = vector.extract_strided_slice %1 {offsets = [0, 32], sizes = [8, 32], strides = [1, 1]} : vector<8x96xbf16> to vector<8x32xbf16>
    %5 = vector.extract_strided_slice %1 {offsets = [0, 64], sizes = [8, 32], strides = [1, 1]} : vector<8x96xbf16> to vector<8x32xbf16>
    %6 = vector.extract_strided_slice %4 {offsets = [0, 0], sizes = [8, 8], strides = [1, 1]} : vector<8x32xbf16> to vector<8x8xbf16>
    %7 = vector.extract_strided_slice %5 {offsets = [0, 0], sizes = [8, 8], strides = [1, 1]} : vector<8x32xbf16> to vector<8x8xbf16>
    %8 = vector.extract_strided_slice %1 {offsets = [0, 0], sizes = [8, 8], strides = [1, 1]} : vector<8x96xbf16> to vector<8x8xbf16>
    %cst = arith.constant dense<0.000000e+00> : vector<8x8xf32>
    %9 = tpu.matmul %8, %6, %cst {dimension_numbers = #tpu.dot_dimension_numbers<[1], [1], [0], [0], [0, 0, 1, 0], [], []>} : vector<8x8xbf16>, vector<8x8xbf16>, vector<8x8xf32> -> vector<8x8xf32>
    %10 = vector.broadcast %3 : vector<1x8xf32> to vector<8x8xf32>
    %11 = arith.addf %9, %10 : vector<8x8xf32>
    %cst_5 = arith.constant dense<0xFF800000> : vector<8xf32>
    %12 = vector.multi_reduction <maximumf>, %11, %cst_5 [1] : vector<8x8xf32> to vector<8xf32>
    %13 = vector.shape_cast %12 : vector<8xf32> to vector<8x1xf32>
    %14 = vector.broadcast %13 : vector<8x1xf32> to vector<8x8xf32>
    %15 = arith.subf %11, %14 : vector<8x8xf32>
    %16 = math.exp %15 : vector<8x8xf32>
    %cst_6 = arith.constant dense<0.000000e+00> : vector<8xf32>
    %17 = vector.multi_reduction <add>, %16, %cst_6 [1] : vector<8x8xf32> to vector<8xf32>
    %18 = vector.shape_cast %17 : vector<8xf32> to vector<8x1xf32>
    %19 = tpu.reciprocal %18 {approx = true} : vector<8x1xf32> -> vector<8x1xf32>
    %20 = vector.broadcast %19 : vector<8x1xf32> to vector<8x8xf32>
    %21 = arith.mulf %16, %20 : vector<8x8xf32>
    %22 = arith.truncf %21 : vector<8x8xf32> to vector<8x8xbf16>
    %cst_7 = arith.constant dense<0.000000e+00> : vector<8x8xf32>
    %23 = tpu.matmul %22, %7, %cst_7 {dimension_numbers = #tpu.dot_dimension_numbers<[1], [0], [0], [1], [0, 0, 1, 1], [], []>} : vector<8x8xbf16>, vector<8x8xbf16>, vector<8x8xf32> -> vector<8x8xf32>
    %24 = arith.truncf %23 : vector<8x8xf32> to vector<8x8xbf16>
    %c0_8 = arith.constant 0 : index
    %c0_9 = arith.constant 0 : index
    %c0_10 = arith.constant 0 : index
    %25 = vector.load %arg4[%c0_8, %c0_9, %c0_10] : memref<1x8x32xbf16, #tpu.memory_space<vmem>>, vector<1x8x8xbf16>
    %26 = vector.shape_cast %25 : vector<1x8x8xbf16> to vector<8x8xbf16>
    %27 = vector.shape_cast %24 : vector<8x8xbf16> to vector<1x8x8xbf16>
    tpu.vector_store %arg4[%c0_8, %c0_9, %c0_10], %27 {strides = array<i32>} : memref<1x8x32xbf16, #tpu.memory_space<vmem>>, vector<1x8x8xbf16>,
    %28 = vector.extract_strided_slice %4 {offsets = [0, 8], sizes = [8, 8], strides = [1, 1]} : vector<8x32xbf16> to vector<8x8xbf16>
    %29 = vector.extract_strided_slice %5 {offsets = [0, 8], sizes = [8, 8], strides = [1, 1]} : vector<8x32xbf16> to vector<8x8xbf16>
    %30 = vector.extract_strided_slice %1 {offsets = [0, 8], sizes = [8, 8], strides = [1, 1]} : vector<8x96xbf16> to vector<8x8xbf16>
    %cst_11 = arith.constant dense<0.000000e+00> : vector<8x8xf32>
    %31 = tpu.matmul %30, %28, %cst_11 {dimension_numbers = #tpu.dot_dimension_numbers<[1], [1], [0], [0], [0, 0, 1, 0], [], []>} : vector<8x8xbf16>, vector<8x8xbf16>, vector<8x8xf32> -> vector<8x8xf32>
    %32 = vector.broadcast %3 : vector<1x8xf32> to vector<8x8xf32>
    %33 = arith.addf %31, %32 : vector<8x8xf32>
    %cst_12 = arith.constant dense<0xFF800000> : vector<8xf32>
    %34 = vector.multi_reduction <maximumf>, %33, %cst_12 [1] : vector<8x8xf32> to vector<8xf32>
    %35 = vector.shape_cast %34 : vector<8xf32> to vector<8x1xf32>
    %36 = vector.broadcast %35 : vector<8x1xf32> to vector<8x8xf32>
    %37 = arith.subf %33, %36 : vector<8x8xf32>
    %38 = math.exp %37 : vector<8x8xf32>
    %cst_13 = arith.constant dense<0.000000e+00> : vector<8xf32>
    %39 = vector.multi_reduction <add>, %38, %cst_13 [1] : vector<8x8xf32> to vector<8xf32>
    %40 = vector.shape_cast %39 : vector<8xf32> to vector<8x1xf32>
    %41 = tpu.reciprocal %40 {approx = true} : vector<8x1xf32> -> vector<8x1xf32>
    %42 = vector.broadcast %41 : vector<8x1xf32> to vector<8x8xf32>
    %43 = arith.mulf %38, %42 : vector<8x8xf32>
    %44 = arith.truncf %43 : vector<8x8xf32> to vector<8x8xbf16>
    %cst_14 = arith.constant dense<0.000000e+00> : vector<8x8xf32>
    %45 = tpu.matmul %44, %29, %cst_14 {dimension_numbers = #tpu.dot_dimension_numbers<[1], [0], [0], [1], [0, 0, 1, 1], [], []>} : vector<8x8xbf16>, vector<8x8xbf16>, vector<8x8xf32> -> vector<8x8xf32>
    %46 = arith.truncf %45 : vector<8x8xf32> to vector<8x8xbf16>
    %c0_15 = arith.constant 0 : index
    %c0_16 = arith.constant 0 : index
    %c8 = arith.constant 8 : index
    %47 = vector.load %arg4[%c0_15, %c0_16, %c8] : memref<1x8x32xbf16, #tpu.memory_space<vmem>>, vector<1x8x8xbf16>
    %48 = vector.shape_cast %47 : vector<1x8x8xbf16> to vector<8x8xbf16>
    %49 = vector.shape_cast %46 : vector<8x8xbf16> to vector<1x8x8xbf16>
    tpu.vector_store %arg4[%c0_15, %c0_16, %c8], %49 {strides = array<i32>} : memref<1x8x32xbf16, #tpu.memory_space<vmem>>, vector<1x8x8xbf16>,
    %50 = vector.extract_strided_slice %4 {offsets = [0, 16], sizes = [8, 8], strides = [1, 1]} : vector<8x32xbf16> to vector<8x8xbf16>
    %51 = vector.extract_strided_slice %5 {offsets = [0, 16], sizes = [8, 8], strides = [1, 1]} : vector<8x32xbf16> to vector<8x8xbf16>
    %52 = vector.extract_strided_slice %1 {offsets = [0, 16], sizes = [8, 8], strides = [1, 1]} : vector<8x96xbf16> to vector<8x8xbf16>
    %cst_17 = arith.constant dense<0.000000e+00> : vector<8x8xf32>
    %53 = tpu.matmul %52, %50, %cst_17 {dimension_numbers = #tpu.dot_dimension_numbers<[1], [1], [0], [0], [0, 0, 1, 0], [], []>} : vector<8x8xbf16>, vector<8x8xbf16>, vector<8x8xf32> -> vector<8x8xf32>
    %54 = vector.broadcast %3 : vector<1x8xf32> to vector<8x8xf32>
    %55 = arith.addf %53, %54 : vector<8x8xf32>
    %cst_18 = arith.constant dense<0xFF800000> : vector<8xf32>
    %56 = vector.multi_reduction <maximumf>, %55, %cst_18 [1] : vector<8x8xf32> to vector<8xf32>
    %57 = vector.shape_cast %56 : vector<8xf32> to vector<8x1xf32>
    %58 = vector.broadcast %57 : vector<8x1xf32> to vector<8x8xf32>
    %59 = arith.subf %55, %58 : vector<8x8xf32>
    %60 = math.exp %59 : vector<8x8xf32>
    %cst_19 = arith.constant dense<0.000000e+00> : vector<8xf32>
    %61 = vector.multi_reduction <add>, %60, %cst_19 [1] : vector<8x8xf32> to vector<8xf32>
    %62 = vector.shape_cast %61 : vector<8xf32> to vector<8x1xf32>
    %63 = tpu.reciprocal %62 {approx = true} : vector<8x1xf32> -> vector<8x1xf32>
    %64 = vector.broadcast %63 : vector<8x1xf32> to vector<8x8xf32>
    %65 = arith.mulf %60, %64 : vector<8x8xf32>
    %66 = arith.truncf %65 : vector<8x8xf32> to vector<8x8xbf16>
    %cst_20 = arith.constant dense<0.000000e+00> : vector<8x8xf32>
    %67 = tpu.matmul %66, %51, %cst_20 {dimension_numbers = #tpu.dot_dimension_numbers<[1], [0], [0], [1], [0, 0, 1, 1], [], []>} : vector<8x8xbf16>, vector<8x8xbf16>, vector<8x8xf32> -> vector<8x8xf32>
    %68 = arith.truncf %67 : vector<8x8xf32> to vector<8x8xbf16>
    %c0_21 = arith.constant 0 : index
    %c0_22 = arith.constant 0 : index
    %c16 = arith.constant 16 : index
    %69 = vector.load %arg4[%c0_21, %c0_22, %c16] : memref<1x8x32xbf16, #tpu.memory_space<vmem>>, vector<1x8x8xbf16>
    %70 = vector.shape_cast %69 : vector<1x8x8xbf16> to vector<8x8xbf16>
    %71 = vector.shape_cast %68 : vector<8x8xbf16> to vector<1x8x8xbf16>
    tpu.vector_store %arg4[%c0_21, %c0_22, %c16], %71 {strides = array<i32>} : memref<1x8x32xbf16, #tpu.memory_space<vmem>>, vector<1x8x8xbf16>,
    %72 = vector.extract_strided_slice %4 {offsets = [0, 24], sizes = [8, 8], strides = [1, 1]} : vector<8x32xbf16> to vector<8x8xbf16>
    %73 = vector.extract_strided_slice %5 {offsets = [0, 24], sizes = [8, 8], strides = [1, 1]} : vector<8x32xbf16> to vector<8x8xbf16>
    %74 = vector.extract_strided_slice %1 {offsets = [0, 24], sizes = [8, 8], strides = [1, 1]} : vector<8x96xbf16> to vector<8x8xbf16>
    %cst_23 = arith.constant dense<0.000000e+00> : vector<8x8xf32>
    %75 = tpu.matmul %74, %72, %cst_23 {dimension_numbers = #tpu.dot_dimension_numbers<[1], [1], [0], [0], [0, 0, 1, 0], [], []>} : vector<8x8xbf16>, vector<8x8xbf16>, vector<8x8xf32> -> vector<8x8xf32>
    %76 = vector.broadcast %3 : vector<1x8xf32> to vector<8x8xf32>
    %77 = arith.addf %75, %76 : vector<8x8xf32>
    %cst_24 = arith.constant dense<0xFF800000> : vector<8xf32>
    %78 = vector.multi_reduction <maximumf>, %77, %cst_24 [1] : vector<8x8xf32> to vector<8xf32>
    %79 = vector.shape_cast %78 : vector<8xf32> to vector<8x1xf32>
    %80 = vector.broadcast %79 : vector<8x1xf32> to vector<8x8xf32>
    %81 = arith.subf %77, %80 : vector<8x8xf32>
    %82 = math.exp %81 : vector<8x8xf32>
    %cst_25 = arith.constant dense<0.000000e+00> : vector<8xf32>
    %83 = vector.multi_reduction <add>, %82, %cst_25 [1] : vector<8x8xf32> to vector<8xf32>
    %84 = vector.shape_cast %83 : vector<8xf32> to vector<8x1xf32>
    %85 = tpu.reciprocal %84 {approx = true} : vector<8x1xf32> -> vector<8x1xf32>
    %86 = vector.broadcast %85 : vector<8x1xf32> to vector<8x8xf32>
    %87 = arith.mulf %82, %86 : vector<8x8xf32>
    %88 = arith.truncf %87 : vector<8x8xf32> to vector<8x8xbf16>
    %cst_26 = arith.constant dense<0.000000e+00> : vector<8x8xf32>
    %89 = tpu.matmul %88, %73, %cst_26 {dimension_numbers = #tpu.dot_dimension_numbers<[1], [0], [0], [1], [0, 0, 1, 1], [], []>} : vector<8x8xbf16>, vector<8x8xbf16>, vector<8x8xf32> -> vector<8x8xf32>
    %90 = arith.truncf %89 : vector<8x8xf32> to vector<8x8xbf16>
    %c0_27 = arith.constant 0 : index
    %c0_28 = arith.constant 0 : index
    %c24 = arith.constant 24 : index
    %91 = vector.load %arg4[%c0_27, %c0_28, %c24] : memref<1x8x32xbf16, #tpu.memory_space<vmem>>, vector<1x8x8xbf16>
    %92 = vector.shape_cast %91 : vector<1x8x8xbf16> to vector<8x8xbf16>
    %93 = vector.shape_cast %90 : vector<8x8xbf16> to vector<1x8x8xbf16>
    tpu.vector_store %arg4[%c0_27, %c0_28, %c24], %93 {strides = array<i32>} : memref<1x8x32xbf16, #tpu.memory_space<vmem>>, vector<1x8x8xbf16>,
    return
  }
  func.func @transform_0(%arg0: i32, %arg1: i32) -> (i32, i32, i32) {
    %c0_i32 = arith.constant 0 : i32
    %c0_i32_0 = arith.constant 0 : i32
    return %arg0, %c0_i32, %arg1 : i32, i32, i32
  }
  func.func @transform_1(%arg0: i32, %arg1: i32) -> (i32, i32, i32) {
    %c0_i32 = arith.constant 0 : i32
    %c0_i32_0 = arith.constant 0 : i32
    %c0_i32_1 = arith.constant 0 : i32
    return %arg0, %c0_i32, %c0_i32_0 : i32, i32, i32
  }
  func.func @transform_2(%arg0: i32, %arg1: i32) -> (i32, i32, i32) {
    %c0_i32 = arith.constant 0 : i32
    %c0_i32_0 = arith.constant 0 : i32
    return %arg0, %c0_i32, %arg1 : i32, i32, i32
  }
}

module attributes {stable_mosaic.version = 11 : i64} {
  func.func @_linear_kernel(%arg0: i32, %arg1: i32, %arg2: memref<8x32xbf16, #tpu.memory_space<vmem>>, %arg3: memref<32x64xbf16, #tpu.memory_space<vmem>>, %arg4: memref<1x64xf32, #tpu.memory_space<vmem>>, %arg5: memref<8x64xbf16, #tpu.memory_space<vmem>>) attributes {dimension_semantics = [#tpu.dimension_semantics<parallel>, #tpu.dimension_semantics<parallel>], iteration_bounds = array<i64: 2, 1>, scalar_prefetch = 0 : i64, scratch_operands = 0 : i64, tpu.core_type = #tpu.core_type<tc>, window_params = [{transform_indices = @transform_0, window_bounds = array<i64: 8, 32>}, {transform_indices = @transform_1, window_bounds = array<i64: 32, 64>}, {transform_indices = @transform_2, window_bounds = array<i64: 1, 64>}, {transform_indices = @transform_3, window_bounds = array<i64: 8, 64>}]} {
    %c0 = arith.constant 0 : index
    %c0_0 = arith.constant 0 : index
    %0 = vector.load %arg2[%c0, %c0_0] : memref<8x32xbf16, #tpu.memory_space<vmem>>, vector<8x32xbf16>
    %c0_1 = arith.constant 0 : index
    %c0_2 = arith.constant 0 : index
    %1 = vector.load %arg3[%c0_1, %c0_2] : memref<32x64xbf16, #tpu.memory_space<vmem>>, vector<32x64xbf16>
    %cst = arith.constant dense<0.000000e+00> : vector<8x64xf32>
    %2 = tpu.matmul %0, %1, %cst {dimension_numbers = #tpu.dot_dimension_numbers<[1], [0], [0], [1], [0, 0, 1, 1], [], []>} : vector<8x32xbf16>, vector<32x64xbf16>, vector<8x64xf32> -> vector<8x64xf32>
    %c0_3 = arith.constant 0 : index
    %c0_4 = arith.constant 0 : index
    %3 = vector.load %arg4[%c0_3, %c0_4] : memref<1x64xf32, #tpu.memory_space<vmem>>, vector<1x64xf32>
    %4 = vector.broadcast %3 : vector<1x64xf32> to vector<8x64xf32>
    %5 = arith.addf %2, %4 : vector<8x64xf32>
    %cst_5 = arith.constant 5.000000e-01 : f32
    %6 = vector.broadcast %cst_5 : f32 to vector<8x64xf32>
    %7 = arith.mulf %6, %5 : vector<8x64xf32>
    %cst_6 = arith.constant 4.471500e-02 : f32
    %8 = vector.broadcast %cst_6 : f32 to vector<8x64xf32>
    %9 = arith.mulf %8, %5 : vector<8x64xf32>
    %10 = arith.mulf %9, %5 : vector<8x64xf32>
    %11 = arith.mulf %10, %5 : vector<8x64xf32>
    %12 = arith.addf %5, %11 : vector<8x64xf32>
    %cst_7 = arith.constant 0.797884583 : f32
    %13 = vector.broadcast %cst_7 : f32 to vector<8x64xf32>
    %14 = arith.mulf %13, %12 : vector<8x64xf32>
    %15 = math.tanh %14 : vector<8x64xf32>
    %cst_8 = arith.constant 1.000000e+00 : f32
    %16 = vector.broadcast %cst_8 : f32 to vector<8x64xf32>
    %17 = arith.addf %16, %15 : vector<8x64xf32>
    %18 = arith.mulf %7, %17 : vector<8x64xf32>
    %19 = arith.truncf %18 : vector<8x64xf32> to vector<8x64xbf16>
    %c0_9 = arith.constant 0 : index
    %c0_10 = arith.constant 0 : index
    %20 = vector.load %arg5[%c0_9, %c0_10] : memref<8x64xbf16, #tpu.memory_space<vmem>>, vector<8x64xbf16>
    tpu.vector_store %arg5[%c0_9, %c0_10], %19 {strides = array<i32>} : memref<8x64xbf16, #tpu.memory_space<vmem>>, vector<8x64xbf16>,
    return
  }
  func.func @transform_0(%arg0: i32, %arg1: i32) -> (i32, i32) {
    %c0_i32 = arith.constant 0 : i32
    %c0_i32_0 = arith.constant 0 : i32
    return %arg0, %c0_i32 : i32, i32
  }
  func.func @transform_1(%arg0: i32, %arg1: i32) -> (i32, i32) {
    %c0_i32 = arith.constant 0 : i32
    %c0_i32_0 = arith.constant 0 : i32
    return %c0_i32, %arg1 : i32, i32
  }
  func.func @transform_2(%arg0: i32, %arg1: i32) -> (i32, i32) {
    %c0_i32 = arith.constant 0 : i32
    %c0_i32_0 = arith.constant 0 : i32
    return %c0_i32, %arg1 : i32, i32
  }
  func.func @transform_3(%arg0: i32, %arg1: i32) -> (i32, i32) {
    %c0_i32 = arith.constant 0 : i32
    return %arg0, %arg1 : i32, i32
  }
}

module attributes {stable_mosaic.version = 11 : i64} {
  func.func @_linear_residual_ln_kernel(%arg0: i32, %arg1: memref<8x64xbf16, #tpu.memory_space<vmem>>, %arg2: memref<64x32xbf16, #tpu.memory_space<vmem>>, %arg3: memref<1x32xf32, #tpu.memory_space<vmem>>, %arg4: memref<8x32xbf16, #tpu.memory_space<vmem>>, %arg5: memref<1x32xf32, #tpu.memory_space<vmem>>, %arg6: memref<1x32xf32, #tpu.memory_space<vmem>>, %arg7: memref<8x32xbf16, #tpu.memory_space<vmem>>) attributes {dimension_semantics = [#tpu.dimension_semantics<parallel>], iteration_bounds = array<i64: 2>, scalar_prefetch = 0 : i64, scratch_operands = 0 : i64, tpu.core_type = #tpu.core_type<tc>, window_params = [{transform_indices = @transform_0, window_bounds = array<i64: 8, 64>}, {pipeline_mode = #tpu.pipeline_mode<synchronous>, transform_indices = @transform_1, window_bounds = array<i64: 64, 32>}, {pipeline_mode = #tpu.pipeline_mode<synchronous>, transform_indices = @transform_2, window_bounds = array<i64: 1, 32>}, {transform_indices = @transform_3, window_bounds = array<i64: 8, 32>}, {pipeline_mode = #tpu.pipeline_mode<synchronous>, transform_indices = @transform_4, window_bounds = array<i64: 1, 32>}, {pipeline_mode = #tpu.pipeline_mode<synchronous>, transform_indices = @transform_5, window_bounds = array<i64: 1, 32>}, {transform_indices = @transform_6, window_bounds = array<i64: 8, 32>}]} {
    %c0 = arith.constant 0 : index
    %c0_0 = arith.constant 0 : index
    %0 = vector.load %arg1[%c0, %c0_0] : memref<8x64xbf16, #tpu.memory_space<vmem>>, vector<8x64xbf16>
    %c0_1 = arith.constant 0 : index
    %c0_2 = arith.constant 0 : index
    %1 = vector.load %arg2[%c0_1, %c0_2] : memref<64x32xbf16, #tpu.memory_space<vmem>>, vector<64x32xbf16>
    %cst = arith.constant dense<0.000000e+00> : vector<8x32xf32>
    %2 = tpu.matmul %0, %1, %cst {dimension_numbers = #tpu.dot_dimension_numbers<[1], [0], [0], [1], [0, 0, 1, 1], [], []>} : vector<8x64xbf16>, vector<64x32xbf16>, vector<8x32xf32> -> vector<8x32xf32>
    %c0_3 = arith.constant 0 : index
    %c0_4 = arith.constant 0 : index
    %3 = vector.load %arg3[%c0_3, %c0_4] : memref<1x32xf32, #tpu.memory_space<vmem>>, vector<1x32xf32>
    %4 = vector.broadcast %3 : vector<1x32xf32> to vector<8x32xf32>
    %5 = arith.addf %2, %4 : vector<8x32xf32>
    %c0_5 = arith.constant 0 : index
    %c0_6 = arith.constant 0 : index
    %6 = vector.load %arg4[%c0_5, %c0_6] : memref<8x32xbf16, #tpu.memory_space<vmem>>, vector<8x32xbf16>
    %7 = arith.extf %6 : vector<8x32xbf16> to vector<8x32xf32>
    %8 = arith.addf %5, %7 : vector<8x32xf32>
    %c0_7 = arith.constant 0 : index
    %c0_8 = arith.constant 0 : index
    %9 = vector.load %arg5[%c0_7, %c0_8] : memref<1x32xf32, #tpu.memory_space<vmem>>, vector<1x32xf32>
    %c0_9 = arith.constant 0 : index
    %c0_10 = arith.constant 0 : index
    %10 = vector.load %arg6[%c0_9, %c0_10] : memref<1x32xf32, #tpu.memory_space<vmem>>, vector<1x32xf32>
    %cst_11 = arith.constant dense<0.000000e+00> : vector<8xf32>
    %11 = vector.multi_reduction <add>, %8, %cst_11 [1] : vector<8x32xf32> to vector<8xf32>
    %12 = vector.shape_cast %11 : vector<8xf32> to vector<8x1xf32>
    %cst_12 = arith.constant 3.200000e+01 : f32
    %13 = vector.broadcast %cst_12 : f32 to vector<8x1xf32>
    %14 = arith.divf %12, %13 : vector<8x1xf32>
    %15 = vector.broadcast %14 : vector<8x1xf32> to vector<8x32xf32>
    %16 = arith.subf %8, %15 : vector<8x32xf32>
    %17 = arith.mulf %16, %16 : vector<8x32xf32>
    %cst_13 = arith.constant dense<0.000000e+00> : vector<8xf32>
    %18 = vector.multi_reduction <add>, %17, %cst_13 [1] : vector<8x32xf32> to vector<8xf32>
    %19 = vector.shape_cast %18 : vector<8xf32> to vector<8x1xf32>
    %cst_14 = arith.constant 3.200000e+01 : f32
    %20 = vector.broadcast %cst_14 : f32 to vector<8x1xf32>
    %21 = arith.divf %19, %20 : vector<8x1xf32>
    %22 = vector.broadcast %14 : vector<8x1xf32> to vector<8x32xf32>
    %23 = arith.subf %8, %22 : vector<8x32xf32>
    %cst_15 = arith.constant 9.99999996E-13 : f32
    %24 = vector.broadcast %cst_15 : f32 to vector<8x1xf32>
    %25 = arith.addf %21, %24 : vector<8x1xf32>
    %26 = math.rsqrt %25 : vector<8x1xf32>
    %27 = vector.broadcast %26 : vector<8x1xf32> to vector<8x32xf32>
    %28 = arith.mulf %23, %27 : vector<8x32xf32>
    %29 = vector.broadcast %9 : vector<1x32xf32> to vector<8x32xf32>
    %30 = arith.mulf %28, %29 : vector<8x32xf32>
    %31 = vector.broadcast %10 : vector<1x32xf32> to vector<8x32xf32>
    %32 = arith.addf %30, %31 : vector<8x32xf32>
    %33 = arith.truncf %32 : vector<8x32xf32> to vector<8x32xbf16>
    %c0_16 = arith.constant 0 : index
    %c0_17 = arith.constant 0 : index
    %34 = vector.load %arg7[%c0_16, %c0_17] : memref<8x32xbf16, #tpu.memory_space<vmem>>, vector<8x32xbf16>
    tpu.vector_store %arg7[%c0_16, %c0_17], %33 {strides = array<i32>} : memref<8x32xbf16, #tpu.memory_space<vmem>>, vector<8x32xbf16>,
    return
  }
  func.func @transform_0(%arg0: i32) -> (i32, i32) {
    %c0_i32 = arith.constant 0 : i32
    %c0_i32_0 = arith.constant 0 : i32
    return %arg0, %c0_i32 : i32, i32
  }
  func.func @transform_1(%arg0: i32) -> (i32, i32) {
    %c0_i32 = arith.constant 0 : i32
    %c0_i32_0 = arith.constant 0 : i32
    %c0_i32_1 = arith.constant 0 : i32
    return %c0_i32, %c0_i32_0 : i32, i32
  }
  func.func @transform_2(%arg0: i32) -> (i32, i32) {
    %c0_i32 = arith.constant 0 : i32
    %c0_i32_0 = arith.constant 0 : i32
    %c0_i32_1 = arith.constant 0 : i32
    return %c0_i32, %c0_i32_0 : i32, i32
  }
  func.func @transform_3(%arg0: i32) -> (i32, i32) {
    %c0_i32 = arith.constant 0 : i32
    %c0_i32_0 = arith.constant 0 : i32
    return %arg0, %c0_i32 : i32, i32
  }
  func.func @transform_4(%arg0: i32) -> (i32, i32) {
    %c0_i32 = arith.constant 0 : i32
    %c0_i32_0 = arith.constant 0 : i32
    %c0_i32_1 = arith.constant 0 : i32
    return %c0_i32, %c0_i32_0 : i32, i32
  }
  func.func @transform_5(%arg0: i32) -> (i32, i32) {
    %c0_i32 = arith.constant 0 : i32
    %c0_i32_0 = arith.constant 0 : i32
    %c0_i32_1 = arith.constant 0 : i32
    return %c0_i32, %c0_i32_0 : i32, i32
  }
  func.func @transform_6(%arg0: i32) -> (i32, i32) {
    %c0_i32 = arith.constant 0 : i32
    %c0_i32_0 = arith.constant 0 : i32
    return %arg0, %c0_i32 : i32, i32
  }
}

</mosaic_0001>

<llo_original>
// kernel: bert_sentiment_forward.11
$region0: #{bert_sentiment_forward.11}
  #allocation0 [shape = 'u32[]', space=smem, size = 0x4, offset = 0x4, fixed_abs, tag = 'smem constant byte address 0x4 - core index']
  #allocation1 [shape = 'u32[72,128]{1,0:T(1,128)}', space=vmem, size = 0x9000, scoped, tag = 'internal scratch']
  %s0 = inlined_call_operand.vmem [shape: f32[16,32], index: 0, kind: input, shape index: {}]
  %s1 = inlined_call_operand.vmem [shape: f32[1,32], index: 1, kind: input, shape index: {}]
  %s2 = inlined_call_operand.vmem [shape: f32[1,32], index: 2, kind: input, shape index: {}]
  %s3 = inlined_call_operand.vmem [shape: bf16[16,32], index: 3, kind: output, shape index: {}]
  %s4 = sld [smem:[#allocation0]]
  $region45: #{bert_sentiment_forward.11} parent=0
    _
  %s6 = ssub.s32 1, %s4
  %s7 = scalar_select 0, %s6, %s4
  loop: start=0, step=1, limit=4
  $region2: #{bert_sentiment_forward.11} parent=0 // loop_pre_header
    _
  $region3: #{bert_sentiment_forward.11} parent=0 // loop_header
    %s9 = sphi 0, %s13
    %p10 = scmp.ge.s32.totalorder %s9, 4
    %s19 = sphi 0, %s21
    %s22 = sphi 0, %s19
    %s23 = sphi 0, %s22
    %s39 = sphi 0, %s23
    %s43 = sphi 0, %s43
    %s45 = sphi 0, %s43
    %s46 = sphi 0, %s45
    %s60 = sphi 0, %s46
    %s64 = sphi 0, %s64
    %s66 = sphi 0, %s64
    %s67 = sphi 0, %s66
    %s81 = sphi 0, %s67
    %s87 = sphi 0, %s89
    %s90 = sphi 0, %s87
    %s91 = sphi 0, %s90
    %s107 = sphi 0, %s91
  $region4: #{bert_sentiment_forward.11} parent=0 // loop_header_branch
    %12 = sbr.rel (%p10) target = $region8
  $region5: #{bert_sentiment_forward.11} parent=0 // loop_body
    %s14 = ssub.s32 %s9, 1
    %s15 = ssub.s32 %s9, 2
    %s16 = sadd.s32 %s9, 1
    %s17 = ssub.s32 %s9, %s16
    %p18 = scmp.eq.s32.totalorder %s17, 0
    %s20 = sadd.s32 %s19, 1
    %s21 = scalar_select %p18, %s19, %s20
    %p24 = pneg %p18
    %p25 = scmp.eq.s32.totalorder %s9, 1
    %p26 = por %p24, %p25
    %p27 = scmp.ne.s32.totalorder %s19, %s22
    %p28 = scmp.eq.s32.totalorder %s9, 0
    %p29 = por %p27, %p28
    %p30 = scmp.ne.s32.totalorder %s19, %s22
    %p31 = scmp.eq.s32.totalorder %s14, 1
    %p32 = por %p30, %p31
    %p33 = scmp.ne.s32.totalorder %s22, %s23
    %p34 = scmp.eq.s32.totalorder %s14, 0
    %p35 = por %p33, %p34
    %p36 = scmp.ne.s32.totalorder %s22, %s23
    %p37 = scmp.eq.s32.totalorder %s15, 1
    %p38 = por %p36, %p37
    %p40 = scmp.ne.s32.totalorder %s23, %s39
    %p41 = scmp.eq.s32.totalorder %s15, 0
    %p42 = por %p40, %p41
    %s44 = sadd.s32 %s43, 1
    %p47 = scmp.eq.s32.totalorder %s9, 1
    %p48 = scmp.ne.s32.totalorder %s43, %s45
    %p49 = scmp.eq.s32.totalorder %s9, 0
    %p50 = por %p48, %p49
    %p51 = scmp.ne.s32.totalorder %s43, %s45
    %p52 = scmp.eq.s32.totalorder %s14, 1
    %p53 = por %p51, %p52
    %p54 = scmp.ne.s32.totalorder %s45, %s46
    %p55 = scmp.eq.s32.totalorder %s14, 0
    %p56 = por %p54, %p55
    %p57 = scmp.ne.s32.totalorder %s45, %s46
    %p58 = scmp.eq.s32.totalorder %s15, 1
    %p59 = por %p57, %p58
    %p61 = scmp.ne.s32.totalorder %s46, %s60
    %p62 = scmp.eq.s32.totalorder %s15, 0
    %p63 = por %p61, %p62
    %s65 = sadd.s32 %s64, 1
    %p68 = scmp.eq.s32.totalorder %s9, 1
    %p69 = scmp.ne.s32.totalorder %s64, %s66
    %p70 = scmp.eq.s32.totalorder %s9, 0
    %p71 = por %p69, %p70
    %p72 = scmp.ne.s32.totalorder %s64, %s66
    %p73 = scmp.eq.s32.totalorder %s14, 1
    %p74 = por %p72, %p73
    %p75 = scmp.ne.s32.totalorder %s66, %s67
    %p76 = scmp.eq.s32.totalorder %s14, 0
    %p77 = por %p75, %p76
    %p78 = scmp.ne.s32.totalorder %s66, %s67
    %p79 = scmp.eq.s32.totalorder %s15, 1
    %p80 = por %p78, %p79
    %p82 = scmp.ne.s32.totalorder %s67, %s81
    %p83 = scmp.eq.s32.totalorder %s15, 0
    %p84 = por %p82, %p83
    %s85 = ssub.s32 %s9, %s16
    %p86 = scmp.eq.s32.totalorder %s85, 0
    %s88 = sadd.s32 %s87, 1
    %s89 = scalar_select %p86, %s87, %s88
    %p92 = pneg %p86
    %p93 = scmp.eq.s32.totalorder %s9, 1
    %p94 = por %p92, %p93
    %p95 = scmp.ne.s32.totalorder %s87, %s90
    %p96 = scmp.eq.s32.totalorder %s9, 0
    %p97 = por %p95, %p96
    %p98 = scmp.ne.s32.totalorder %s87, %s90
    %p99 = scmp.eq.s32.totalorder %s14, 1
    %p100 = por %p98, %p99
    %p101 = scmp.ne.s32.totalorder %s90, %s91
    %p102 = scmp.eq.s32.totalorder %s14, 0
    %p103 = por %p101, %p102
    %p104 = scmp.ne.s32.totalorder %s90, %s91
    %p105 = scmp.eq.s32.totalorder %s15, 1
    %p106 = por %p104, %p105
    %p108 = scmp.ne.s32.totalorder %s91, %s107
    %p109 = scmp.eq.s32.totalorder %s15, 0
    %p110 = por %p108, %p109
    %p111 = scmp.le.s32.totalorder 1, %s9
    %p112 = scmp.lt.s32.totalorder %s9, 3
    %p113 = pnand %p111, %p112
    %p114 = pneg %p113
    // Predicated region
    $region9: #{bert_sentiment_forward.11} parent=5 // pred_check
      _
    $region10: #{bert_sentiment_forward.11} parent=5 // pred_check_branch
      %116 = sbr.rel (%p113) target = $region12
    $region11: #{bert_sentiment_forward.11} parent=5 // pred_region
      %s117 = ssub.s32 %s9, 1
      // Predicated region
      $region13: #{bert_sentiment_forward.11} parent=11 // pred_check
        %p118 = pneg %p56
      $region14: #{bert_sentiment_forward.11} parent=11 // pred_check_branch
        %120 = sbr.rel (%p118) target = $region16
      $region15: #{bert_sentiment_forward.11} parent=11 // pred_region
        _
      $region16: #{bert_sentiment_forward.11} parent=11 // pred_fallthru
        _
      // Predicated region
      $region17: #{bert_sentiment_forward.11} parent=11 // pred_check
        %p121 = pneg %p77
      $region18: #{bert_sentiment_forward.11} parent=11 // pred_check_branch
        %123 = sbr.rel (%p121) target = $region20
      $region19: #{bert_sentiment_forward.11} parent=11 // pred_region
        _
      $region20: #{bert_sentiment_forward.11} parent=11 // pred_fallthru
        _
    $region12: #{bert_sentiment_forward.11} parent=5 // pred_fallthru
      _
    %p124 = scmp.lt.s32.totalorder %s9, 2
    // Predicated region
    $region21: #{bert_sentiment_forward.11} parent=5 // pred_check
      %p125 = pneg %p124
    $region22: #{bert_sentiment_forward.11} parent=5 // pred_check_branch
      %127 = sbr.rel (%p125) target = $region24
    $region23: #{bert_sentiment_forward.11} parent=5 // pred_region
      // Predicated region
      $region25: #{bert_sentiment_forward.11} parent=23 // pred_check
        %p128 = pneg %p29
      $region26: #{bert_sentiment_forward.11} parent=23 // pred_check_branch
        %130 = sbr.rel (%p128) target = $region28
      $region27: #{bert_sentiment_forward.11} parent=23 // pred_region
        %p131 = scmp.lt.s32.totalorder %s9, 1
        %s132 = scalar_select %p131, %s9, 1
        %s133 = smul.addr %s132, 8
        %s134 = scalar_lea.vmem %s0, %s133
      $region28: #{bert_sentiment_forward.11} parent=23 // pred_fallthru
        _
    $region24: #{bert_sentiment_forward.11} parent=5 // pred_fallthru
      _
    %p135 = scmp.le.s32.totalorder 1, %s9
    %p136 = scmp.lt.s32.totalorder %s9, 3
    %p137 = pnand %p135, %p136
    %p138 = pneg %p137
    // Predicated region
    $region29: #{bert_sentiment_forward.11} parent=5 // pred_check
      _
    $region30: #{bert_sentiment_forward.11} parent=5 // pred_check_branch
      %140 = sbr.rel (%p137) target = $region32
    $region31: #{bert_sentiment_forward.11} parent=5 // pred_region
      %s141 = ssub.s32 %s9, 1
      %p142 = scmp.lt.s32.totalorder %s14, 1
      %s143 = scalar_select %p142, %s14, 1
      %s144 = smul.addr %s143, 8
      %s145 = scalar_lea.vmem %s0, %s144
      %p146 = pneg %p35
      %p147 = pneg %p32
      %p148 = pneg %p56
      %p149 = pneg %p53
      %p150 = pneg %p77
      %p151 = pneg %p74
      %p152 = pneg %p103
      %p153 = pneg %p100
      %p154 = scmp.lt.s32.totalorder %s14, 1
      %s155 = scalar_select %p154, %s14, 1
      %s156 = smul.addr %s155, 4
      %s157 = scalar_lea.vmem %s3, %s156
      %p158 = scmp.lt.s32.totalorder %s14, 1
      %s159 = scalar_select %p158, %s14, 1
      %s160 = smul.addr %s159, 8
      %s161 = scalar_lea.vmem %s0, %s160
      %p162 = scmp.lt.s32.totalorder %s14, 1
      %s163 = scalar_select %p162, %s14, 1
      %s164 = smul.addr %s163, 4
      %s165 = scalar_lea.vmem %s3, %s164
      %v166 = vld [vmem:[%s161] sm:$0xff]
      %v167 = vld [vmem:[%s1] sm:$0x1]
      %v168 = vld [vmem:[%s2] sm:$0x1]
      %vm169 = vcmask 261120
      %v170 = vsel %vm169, %v166, 0.0
      %171 = vadd.xlane.f32.xlu0 %v170
      %v172 = vpop.xlane.xlu0 %171
      %v173 = vrcp.pop 32.0
      %v174 = vmul.f32 32.0, %v173
      %v175 = vsub.f32 1.0, %v174
      %v176 = vmul.f32 %v173, %v175
      %v177 = vadd.f32 %v173, %v176
      %vm178 = vweird.f32 %v173
      %v179 = vsel %vm178, %v173, %v177
      %v180 = vmul.f32 %v172, %v179
      %v181 = vsub.f32 %v166, %v180
      %v182 = vmul.f32 %v181, %v181
      %v183 = vsel %vm169, %v182, 0.0
      %184 = vadd.xlane.f32.xlu0 %v183
      %v185 = vpop.xlane.xlu0 %184
      %v186 = vmul.f32 %v185, %v179
      %v187 = vadd.f32 %v186, 1e-12
      %v188 = vrsqrt.pop %v187
      %v189 = vmul.f32 %v188, %v187
      %v190 = vmul.f32 %v189, %v188
      %v191 = vmul.f32 0.5, %v190
      %v192 = vsub.f32 1.5, %v191
      %v193 = vmul.f32 %v188, %v192
      %vm194 = vweird.f32 %v187
      %vm195 = vweird.f32 %v188
      %vm196 = vmor %vm194, %vm195
      %v197 = vsel %vm196, %v188, %v193
      %v198 = vmul.f32 %v181, %v197
      %v200 = vperm.slane %v167, 0
      %v202 = vmul.f32 %v198, %v200
      %v204 = vperm.slane %v168, 0
      %v206 = vadd.f32 %v202, %v204
      %v207 = vpack.c.bf16 %v206, %v206
      %vm208 = vcmask 257024
      %209 = vst.msk [vmem:[%s165] sm:$0xf] %vm208, %v207
      %p210 = scmp.lt.s32.totalorder %s14, 1
      %s211 = scalar_select %p210, %s14, 1
      %s212 = smul.addr %s211, 4
      %s213 = scalar_lea.vmem %s3, %s212
      // Predicated region
      $region33: #{bert_sentiment_forward.11} parent=31 // pred_check
        %p214 = pneg %p100
      $region34: #{bert_sentiment_forward.11} parent=31 // pred_check_branch
        %216 = sbr.rel (%p214) target = $region36
      $region35: #{bert_sentiment_forward.11} parent=31 // pred_region
        _
      $region36: #{bert_sentiment_forward.11} parent=31 // pred_fallthru
        _
    $region32: #{bert_sentiment_forward.11} parent=5 // pred_fallthru
      _
    %p217 = scmp.le.s32.totalorder 2, %s9
    // Predicated region
    $region37: #{bert_sentiment_forward.11} parent=5 // pred_check
      %p218 = pneg %p217
    $region38: #{bert_sentiment_forward.11} parent=5 // pred_check_branch
      %220 = sbr.rel (%p218) target = $region40
    $region39: #{bert_sentiment_forward.11} parent=5 // pred_region
      %s221 = ssub.s32 %s9, 2
      // Predicated region
      $region41: #{bert_sentiment_forward.11} parent=39 // pred_check
        %p222 = pneg %p106
      $region42: #{bert_sentiment_forward.11} parent=39 // pred_check_branch
        %224 = sbr.rel (%p222) target = $region44
      $region43: #{bert_sentiment_forward.11} parent=39 // pred_region
        %p225 = scmp.lt.s32.totalorder %s15, 1
        %s226 = scalar_select %p225, %s15, 1
        %s227 = smul.addr %s226, 4
        %s228 = scalar_lea.vmem %s3, %s227
      $region44: #{bert_sentiment_forward.11} parent=39 // pred_fallthru
        _
    $region40: #{bert_sentiment_forward.11} parent=5 // pred_fallthru
      _
  $region6: #{bert_sentiment_forward.11} parent=0 // loop_footer
    %s13 = sadd.s32 1, %s9
  $region7: #{bert_sentiment_forward.11} parent=0 // loop_footer_branch
    %8 = sbr.rel target = $region3
  $region8: #{bert_sentiment_forward.11} parent=0 // loop_exit
    _

// kernel: bert_sentiment_forward.12
$region0: #{bert_sentiment_forward.12}
  #allocation0 [shape = 'u32[]', space=smem, size = 0x4, offset = 0x4, fixed_abs, tag = 'smem constant byte address 0x4 - core index']
  #allocation1 [shape = 'u32[72,128]{1,0:T(1,128)}', space=vmem, size = 0x9000, scoped, tag = 'internal scratch']
  %s0 = inlined_call_operand.vmem [shape: bf16[16,32], index: 0, kind: input, shape index: {}]
  %s1 = inlined_call_operand.vmem [shape: bf16[32,96], index: 1, kind: input, shape index: {}]
  %s2 = inlined_call_operand.vmem [shape: f32[1,96], index: 2, kind: input, shape index: {}]
  %s3 = inlined_call_operand.vmem [shape: bf16[16,96], index: 3, kind: output, shape index: {}]
  %s4 = sld [smem:[#allocation0]]
  $region45: #{bert_sentiment_forward.12} parent=0
    _
  %s6 = ssub.s32 1, %s4
  %s7 = scalar_select 0, %s6, %s4
  loop: start=0, step=1, limit=4
  $region2: #{bert_sentiment_forward.12} parent=0 // loop_pre_header
    _
  $region3: #{bert_sentiment_forward.12} parent=0 // loop_header
    %s9 = sphi 0, %s13
    %p10 = scmp.ge.s32.totalorder %s9, 4
    %s16 = sphi 0, %s28
    %s17 = sphi 0, %s24
    %s18 = sphi 0, %s16
    %s19 = sphi 0, %s17
    %s20 = sphi 0, %s18
    %s21 = sphi 0, %s19
    %s31 = sphi 0, %s33
    %s34 = sphi 0, %s31
    %s35 = sphi 0, %s34
    %s51 = sphi 0, %s35
    %s57 = sphi 0, %s59
    %s60 = sphi 0, %s57
    %s61 = sphi 0, %s60
    %s77 = sphi 0, %s61
    %s83 = sphi 0, %s85
    %s86 = sphi 0, %s83
    %s87 = sphi 0, %s86
    %s103 = sphi 0, %s87
    %s111 = sphi 0, %s113
    %s114 = sphi 0, %s111
    %s115 = sphi 0, %s114
    %s131 = sphi 0, %s115
  $region4: #{bert_sentiment_forward.12} parent=0 // loop_header_branch
    %12 = sbr.rel (%p10) target = $region8
  $region5: #{bert_sentiment_forward.12} parent=0 // loop_body
    %s14 = ssub.s32 %s9, 1
    %s15 = ssub.s32 %s9, 2
    %s22 = sadd.s32 1, %s17
    %p23 = scmp.ge.s32.totalorder %s22, 1
    %s24 = scalar_select %p23, 0, %s22
    %s25 = sadd.s32 1, %s16
    %s26 = scalar_select %p23, %s25, %s16
    %p27 = scmp.ge.s32.totalorder %s26, 2
    %s28 = scalar_select %p27, 0, %s26
    %s29 = ssub.s32 %s16, %s28
    %p30 = scmp.eq.s32.totalorder %s29, 0
    %s32 = sadd.s32 %s31, 1
    %s33 = scalar_select %p30, %s31, %s32
    %p36 = pneg %p30
    %p37 = scmp.eq.s32.totalorder %s9, 1
    %p38 = por %p36, %p37
    %p39 = scmp.ne.s32.totalorder %s31, %s34
    %p40 = scmp.eq.s32.totalorder %s9, 0
    %p41 = por %p39, %p40
    %p42 = scmp.ne.s32.totalorder %s31, %s34
    %p43 = scmp.eq.s32.totalorder %s14, 1
    %p44 = por %p42, %p43
    %p45 = scmp.ne.s32.totalorder %s34, %s35
    %p46 = scmp.eq.s32.totalorder %s14, 0
    %p47 = por %p45, %p46
    %p48 = scmp.ne.s32.totalorder %s34, %s35
    %p49 = scmp.eq.s32.totalorder %s15, 1
    %p50 = por %p48, %p49
    %p52 = scmp.ne.s32.totalorder %s35, %s51
    %p53 = scmp.eq.s32.totalorder %s15, 0
    %p54 = por %p52, %p53
    %s55 = ssub.s32 %s17, %s24
    %p56 = scmp.eq.s32.totalorder %s55, 0
    %s58 = sadd.s32 %s57, 1
    %s59 = scalar_select %p56, %s57, %s58
    %p62 = pneg %p56
    %p63 = scmp.eq.s32.totalorder %s9, 1
    %p64 = por %p62, %p63
    %p65 = scmp.ne.s32.totalorder %s57, %s60
    %p66 = scmp.eq.s32.totalorder %s9, 0
    %p67 = por %p65, %p66
    %p68 = scmp.ne.s32.totalorder %s57, %s60
    %p69 = scmp.eq.s32.totalorder %s14, 1
    %p70 = por %p68, %p69
    %p71 = scmp.ne.s32.totalorder %s60, %s61
    %p72 = scmp.eq.s32.totalorder %s14, 0
    %p73 = por %p71, %p72
    %p74 = scmp.ne.s32.totalorder %s60, %s61
    %p75 = scmp.eq.s32.totalorder %s15, 1
    %p76 = por %p74, %p75
    %p78 = scmp.ne.s32.totalorder %s61, %s77
    %p79 = scmp.eq.s32.totalorder %s15, 0
    %p80 = por %p78, %p79
    %s81 = ssub.s32 %s17, %s24
    %p82 = scmp.eq.s32.totalorder %s81, 0
    %s84 = sadd.s32 %s83, 1
    %s85 = scalar_select %p82, %s83, %s84
    %p88 = pneg %p82
    %p89 = scmp.eq.s32.totalorder %s9, 1
    %p90 = por %p88, %p89
    %p91 = scmp.ne.s32.totalorder %s83, %s86
    %p92 = scmp.eq.s32.totalorder %s9, 0
    %p93 = por %p91, %p92
    %p94 = scmp.ne.s32.totalorder %s83, %s86
    %p95 = scmp.eq.s32.totalorder %s14, 1
    %p96 = por %p94, %p95
    %p97 = scmp.ne.s32.totalorder %s86, %s87
    %p98 = scmp.eq.s32.totalorder %s14, 0
    %p99 = por %p97, %p98
    %p100 = scmp.ne.s32.totalorder %s86, %s87
    %p101 = scmp.eq.s32.totalorder %s15, 1
    %p102 = por %p100, %p101
    %p104 = scmp.ne.s32.totalorder %s87, %s103
    %p105 = scmp.eq.s32.totalorder %s15, 0
    %p106 = por %p104, %p105
    %s107 = ssub.s32 %s16, %s28
    %s108 = ssub.s32 %s17, %s24
    %s109 = sor.u32 %s107, %s108
    %p110 = scmp.eq.s32.totalorder %s109, 0
    %s112 = sadd.s32 %s111, 1
    %s113 = scalar_select %p110, %s111, %s112
    %p116 = pneg %p110
    %p117 = scmp.eq.s32.totalorder %s9, 1
    %p118 = por %p116, %p117
    %p119 = scmp.ne.s32.totalorder %s111, %s114
    %p120 = scmp.eq.s32.totalorder %s9, 0
    %p121 = por %p119, %p120
    %p122 = scmp.ne.s32.totalorder %s111, %s114
    %p123 = scmp.eq.s32.totalorder %s14, 1
    %p124 = por %p122, %p123
    %p125 = scmp.ne.s32.totalorder %s114, %s115
    %p126 = scmp.eq.s32.totalorder %s14, 0
    %p127 = por %p125, %p126
    %p128 = scmp.ne.s32.totalorder %s114, %s115
    %p129 = scmp.eq.s32.totalorder %s15, 1
    %p130 = por %p128, %p129
    %p132 = scmp.ne.s32.totalorder %s115, %s131
    %p133 = scmp.eq.s32.totalorder %s15, 0
    %p134 = por %p132, %p133
    %p135 = scmp.le.s32.totalorder 1, %s9
    %p136 = scmp.lt.s32.totalorder %s9, 3
    %p137 = pnand %p135, %p136
    %p138 = pneg %p137
    // Predicated region
    $region9: #{bert_sentiment_forward.12} parent=5 // pred_check
      _
    $region10: #{bert_sentiment_forward.12} parent=5 // pred_check_branch
      %140 = sbr.rel (%p137) target = $region12
    $region11: #{bert_sentiment_forward.12} parent=5 // pred_region
      %s141 = ssub.s32 %s9, 1
      // Predicated region
      $region13: #{bert_sentiment_forward.12} parent=11 // pred_check
        %p142 = pneg %p73
      $region14: #{bert_sentiment_forward.12} parent=11 // pred_check_branch
        %144 = sbr.rel (%p142) target = $region16
      $region15: #{bert_sentiment_forward.12} parent=11 // pred_region
        %p145 = scmp.lt.s32.totalorder %s19, 0
        %s146 = scalar_select %p145, %s19, 0
        %s147 = smul.addr %s146, 4
        %s148 = scalar_lea.vmem %s1, %s147
      $region16: #{bert_sentiment_forward.12} parent=11 // pred_fallthru
        _
      // Predicated region
      $region17: #{bert_sentiment_forward.12} parent=11 // pred_check
        %p149 = pneg %p99
      $region18: #{bert_sentiment_forward.12} parent=11 // pred_check_branch
        %151 = sbr.rel (%p149) target = $region20
      $region19: #{bert_sentiment_forward.12} parent=11 // pred_region
        %p152 = scmp.lt.s32.totalorder %s19, 0
        %s153 = scalar_select %p152, %s19, 0
        %s154 = scalar_lea.vmem %s2, %s153
      $region20: #{bert_sentiment_forward.12} parent=11 // pred_fallthru
        _
    $region12: #{bert_sentiment_forward.12} parent=5 // pred_fallthru
      _
    %p155 = scmp.lt.s32.totalorder %s9, 2
    // Predicated region
    $region21: #{bert_sentiment_forward.12} parent=5 // pred_check
      %p156 = pneg %p155
    $region22: #{bert_sentiment_forward.12} parent=5 // pred_check_branch
      %158 = sbr.rel (%p156) target = $region24
    $region23: #{bert_sentiment_forward.12} parent=5 // pred_region
      // Predicated region
      $region25: #{bert_sentiment_forward.12} parent=23 // pred_check
        %p159 = pneg %p41
      $region26: #{bert_sentiment_forward.12} parent=23 // pred_check_branch
        %161 = sbr.rel (%p159) target = $region28
      $region27: #{bert_sentiment_forward.12} parent=23 // pred_region
        %p162 = scmp.lt.s32.totalorder %s16, 1
        %s163 = scalar_select %p162, %s16, 1
        %s164 = smul.addr %s163, 4
        %s165 = scalar_lea.vmem %s0, %s164
      $region28: #{bert_sentiment_forward.12} parent=23 // pred_fallthru
        _
    $region24: #{bert_sentiment_forward.12} parent=5 // pred_fallthru
      _
    %p166 = scmp.le.s32.totalorder 1, %s9
    %p167 = scmp.lt.s32.totalorder %s9, 3
    %p168 = pnand %p166, %p167
    %p169 = pneg %p168
    // Predicated region
    $region29: #{bert_sentiment_forward.12} parent=5 // pred_check
      _
    $region30: #{bert_sentiment_forward.12} parent=5 // pred_check_branch
      %171 = sbr.rel (%p168) target = $region32
    $region31: #{bert_sentiment_forward.12} parent=5 // pred_region
      %s172 = ssub.s32 %s9, 1
      %p173 = scmp.lt.s32.totalorder %s18, 1
      %s174 = scalar_select %p173, %s18, 1
      %s175 = smul.addr %s174, 4
      %s176 = scalar_lea.vmem %s0, %s175
      %p177 = pneg %p47
      %p178 = pneg %p44
      %p179 = scmp.lt.s32.totalorder %s19, 0
      %s180 = scalar_select %p179, %s19, 0
      %s181 = smul.addr %s180, 4
      %s182 = scalar_lea.vmem %s1, %s181
      %p183 = pneg %p73
      %p184 = pneg %p70
      %p185 = scmp.lt.s32.totalorder %s19, 0
      %s186 = scalar_select %p185, %s19, 0
      %s187 = scalar_lea.vmem %s2, %s186
      %p188 = pneg %p99
      %p189 = pneg %p96
      %p190 = pneg %p127
      %p191 = pneg %p124
      %p192 = scmp.lt.s32.totalorder %s18, 1
      %s193 = scalar_select %p192, %s18, 1
      %p194 = scmp.lt.s32.totalorder %s19, 0
      %s195 = scalar_select %p194, %s19, 0
      %s196 = sadd.s32 %s195, %s193
      %s197 = smul.addr %s196, 4
      %s198 = scalar_lea.vmem %s3, %s197
      %p199 = scmp.lt.s32.totalorder %s18, 1
      %s200 = scalar_select %p199, %s18, 1
      %s201 = smul.addr %s200, 4
      %s202 = scalar_lea.vmem %s0, %s201
      %p203 = scmp.lt.s32.totalorder %s19, 0
      %s204 = scalar_select %p203, %s19, 0
      %s205 = smul.addr %s204, 4
      %s206 = scalar_lea.vmem %s1, %s205
      %p207 = scmp.lt.s32.totalorder %s19, 0
      %s208 = scalar_select %p207, %s19, 0
      %s209 = scalar_lea.vmem %s2, %s208
      %p210 = scmp.lt.s32.totalorder %s18, 1
      %s211 = scalar_select %p210, %s18, 1
      %p212 = scmp.lt.s32.totalorder %s19, 0
      %s213 = scalar_select %p212, %s19, 0
      %s214 = sadd.s32 %s213, %s211
      %s215 = smul.addr %s214, 4
      %s216 = scalar_lea.vmem %s3, %s215
      %v218 = vld [vmem:[%s202] sm:$0xf]
      %v219 = vld [vmem:[%s206] sm:$0xf]
      %v220 = vld [vmem:[%s206 + $0x4] sm:$0xf]
      %v221 = vld [vmem:[%s206 + $0x8] sm:$0xf]
      %v222 = vld [vmem:[%s206 + $0xc] sm:$0xf]
      %v223 = vld [vmem:[%s209] sm:$0x1]
      %v225 = vperm.slane %v223, 0
      %v231 = vunpack.c.l.b16 %v219
      %v232 = vunpack.c.l.b16 %v220
      %v233 = vunpack.c.l.b16 %v221
      %v234 = vunpack.c.l.b16 %v222
      %v235 = vpack.c.b16 %v232, %v231
      %v236 = vpack.c.b16 %v234, %v233
      %vm239 = vcmask 261120
      %v241 = vsel %vm239, %v218, 0
      %243 = vmatpush.bf16.msra.mxu0 0
      %244 = vmatpush.bf16.msra.mxu0 0
      %245 = vmatpush.bf16.msra.mxu0 0
      %246 = vmatpush.bf16.msra.mxu0 0
      %247 = vmatpush.bf16.msra.mxu0 0
      %248 = vmatpush.bf16.msra.mxu0 0
      %249 = vmatpush.bf16.msra.mxu0 %v236
      %250 = vmatpush.bf16.msra.mxu0 %v235
      %251 = vmatmul.bf16.gmra.mxu0 %v241
      %v252 = vpop.f32.mrf.mxu0
      %v253 = vadd.f32 %v225, %v252
      %v254 = vpop.f32.mrf.mxu0
      %255 = vdwg.mxu0
      %v256 = vpack.c.bf16 %v253, %v253
      %vm257 = vcmask 781312
      %258 = vst.msk [vmem:[%s216] sm:$0xf] %vm257, %v256
      %p259 = scmp.lt.s32.totalorder %s18, 1
      %s260 = scalar_select %p259, %s18, 1
      %p261 = scmp.lt.s32.totalorder %s19, 0
      %s262 = scalar_select %p261, %s19, 0
      %s263 = sadd.s32 %s262, %s260
      %s264 = smul.addr %s263, 4
      %s265 = scalar_lea.vmem %s3, %s264
      // Predicated region
      $region33: #{bert_sentiment_forward.12} parent=31 // pred_check
        %p266 = pneg %p124
      $region34: #{bert_sentiment_forward.12} parent=31 // pred_check_branch
        %268 = sbr.rel (%p266) target = $region36
      $region35: #{bert_sentiment_forward.12} parent=31 // pred_region
        _
      $region36: #{bert_sentiment_forward.12} parent=31 // pred_fallthru
        _
    $region32: #{bert_sentiment_forward.12} parent=5 // pred_fallthru
      _
    %p269 = scmp.le.s32.totalorder 2, %s9
    // Predicated region
    $region37: #{bert_sentiment_forward.12} parent=5 // pred_check
      %p270 = pneg %p269
    $region38: #{bert_sentiment_forward.12} parent=5 // pred_check_branch
      %272 = sbr.rel (%p270) target = $region40
    $region39: #{bert_sentiment_forward.12} parent=5 // pred_region
      %s273 = ssub.s32 %s9, 2
      // Predicated region
      $region41: #{bert_sentiment_forward.12} parent=39 // pred_check
        %p274 = pneg %p130
      $region42: #{bert_sentiment_forward.12} parent=39 // pred_check_branch
        %276 = sbr.rel (%p274) target = $region44
      $region43: #{bert_sentiment_forward.12} parent=39 // pred_region
        %p277 = scmp.lt.s32.totalorder %s20, 1
        %s278 = scalar_select %p277, %s20, 1
        %p279 = scmp.lt.s32.totalorder %s21, 0
        %s280 = scalar_select %p279, %s21, 0
        %s281 = sadd.s32 %s280, %s278
        %s282 = smul.addr %s281, 4
        %s283 = scalar_lea.vmem %s3, %s282
      $region44: #{bert_sentiment_forward.12} parent=39 // pred_fallthru
        _
    $region40: #{bert_sentiment_forward.12} parent=5 // pred_fallthru
      _
  $region6: #{bert_sentiment_forward.12} parent=0 // loop_footer
    %s13 = sadd.s32 1, %s9
  $region7: #{bert_sentiment_forward.12} parent=0 // loop_footer_branch
    %8 = sbr.rel target = $region3
  $region8: #{bert_sentiment_forward.12} parent=0 // loop_exit
    _

// kernel: bert_sentiment_forward.14
$region0: #{bert_sentiment_forward.14}
  #allocation0 [shape = 'u32[]', space=smem, size = 0x4, offset = 0x4, fixed_abs, tag = 'smem constant byte address 0x4 - core index']
  #allocation1 [shape = 'u32[72,128]{1,0:T(1,128)}', space=vmem, size = 0x9000, scoped, tag = 'internal scratch']
  %s0 = inlined_call_operand.vmem [shape: bf16[16,32], index: 0, kind: input, shape index: {}]
  %s1 = inlined_call_operand.vmem [shape: bf16[32,32], index: 1, kind: input, shape index: {}]
  %s2 = inlined_call_operand.vmem [shape: f32[1,32], index: 2, kind: input, shape index: {}]
  %s3 = inlined_call_operand.vmem [shape: bf16[16,32], index: 3, kind: input, shape index: {}]
  %s4 = inlined_call_operand.vmem [shape: f32[1,32], index: 4, kind: input, shape index: {}]
  %s5 = inlined_call_operand.vmem [shape: f32[1,32], index: 5, kind: input, shape index: {}]
  %s6 = inlined_call_operand.vmem [shape: bf16[16,32], index: 6, kind: output, shape index: {}]
  %s7 = sld [smem:[#allocation0]]
  $region57: #{bert_sentiment_forward.14} parent=0
    _
  %s9 = ssub.s32 1, %s7
  %s10 = scalar_select 0, %s9, %s7
  loop: start=0, step=1, limit=4
  $region2: #{bert_sentiment_forward.14} parent=0 // loop_pre_header
    _
  $region3: #{bert_sentiment_forward.14} parent=0 // loop_header
    %s12 = sphi 0, %s16
    %p13 = scmp.ge.s32.totalorder %s12, 4
    %s22 = sphi 0, %s24
    %s25 = sphi 0, %s22
    %s26 = sphi 0, %s25
    %s42 = sphi 0, %s26
    %s46 = sphi 0, %s46
    %s48 = sphi 0, %s46
    %s49 = sphi 0, %s48
    %s63 = sphi 0, %s49
    %s67 = sphi 0, %s67
    %s69 = sphi 0, %s67
    %s70 = sphi 0, %s69
    %s84 = sphi 0, %s70
    %s90 = sphi 0, %s92
    %s93 = sphi 0, %s90
    %s94 = sphi 0, %s93
    %s110 = sphi 0, %s94
    %s114 = sphi 0, %s114
    %s116 = sphi 0, %s114
    %s117 = sphi 0, %s116
    %s131 = sphi 0, %s117
    %s135 = sphi 0, %s135
    %s137 = sphi 0, %s135
    %s138 = sphi 0, %s137
    %s152 = sphi 0, %s138
    %s158 = sphi 0, %s160
    %s161 = sphi 0, %s158
    %s162 = sphi 0, %s161
    %s178 = sphi 0, %s162
  $region4: #{bert_sentiment_forward.14} parent=0 // loop_header_branch
    %15 = sbr.rel (%p13) target = $region8
  $region5: #{bert_sentiment_forward.14} parent=0 // loop_body
    %s17 = ssub.s32 %s12, 1
    %s18 = ssub.s32 %s12, 2
    %s19 = sadd.s32 %s12, 1
    %s20 = ssub.s32 %s12, %s19
    %p21 = scmp.eq.s32.totalorder %s20, 0
    %s23 = sadd.s32 %s22, 1
    %s24 = scalar_select %p21, %s22, %s23
    %p27 = pneg %p21
    %p28 = scmp.eq.s32.totalorder %s12, 1
    %p29 = por %p27, %p28
    %p30 = scmp.ne.s32.totalorder %s22, %s25
    %p31 = scmp.eq.s32.totalorder %s12, 0
    %p32 = por %p30, %p31
    %p33 = scmp.ne.s32.totalorder %s22, %s25
    %p34 = scmp.eq.s32.totalorder %s17, 1
    %p35 = por %p33, %p34
    %p36 = scmp.ne.s32.totalorder %s25, %s26
    %p37 = scmp.eq.s32.totalorder %s17, 0
    %p38 = por %p36, %p37
    %p39 = scmp.ne.s32.totalorder %s25, %s26
    %p40 = scmp.eq.s32.totalorder %s18, 1
    %p41 = por %p39, %p40
    %p43 = scmp.ne.s32.totalorder %s26, %s42
    %p44 = scmp.eq.s32.totalorder %s18, 0
    %p45 = por %p43, %p44
    %s47 = sadd.s32 %s46, 1
    %p50 = scmp.eq.s32.totalorder %s12, 1
    %p51 = scmp.ne.s32.totalorder %s46, %s48
    %p52 = scmp.eq.s32.totalorder %s12, 0
    %p53 = por %p51, %p52
    %p54 = scmp.ne.s32.totalorder %s46, %s48
    %p55 = scmp.eq.s32.totalorder %s17, 1
    %p56 = por %p54, %p55
    %p57 = scmp.ne.s32.totalorder %s48, %s49
    %p58 = scmp.eq.s32.totalorder %s17, 0
    %p59 = por %p57, %p58
    %p60 = scmp.ne.s32.totalorder %s48, %s49
    %p61 = scmp.eq.s32.totalorder %s18, 1
    %p62 = por %p60, %p61
    %p64 = scmp.ne.s32.totalorder %s49, %s63
    %p65 = scmp.eq.s32.totalorder %s18, 0
    %p66 = por %p64, %p65
    %s68 = sadd.s32 %s67, 1
    %p71 = scmp.eq.s32.totalorder %s12, 1
    %p72 = scmp.ne.s32.totalorder %s67, %s69
    %p73 = scmp.eq.s32.totalorder %s12, 0
    %p74 = por %p72, %p73
    %p75 = scmp.ne.s32.totalorder %s67, %s69
    %p76 = scmp.eq.s32.totalorder %s17, 1
    %p77 = por %p75, %p76
    %p78 = scmp.ne.s32.totalorder %s69, %s70
    %p79 = scmp.eq.s32.totalorder %s17, 0
    %p80 = por %p78, %p79
    %p81 = scmp.ne.s32.totalorder %s69, %s70
    %p82 = scmp.eq.s32.totalorder %s18, 1
    %p83 = por %p81, %p82
    %p85 = scmp.ne.s32.totalorder %s70, %s84
    %p86 = scmp.eq.s32.totalorder %s18, 0
    %p87 = por %p85, %p86
    %s88 = ssub.s32 %s12, %s19
    %p89 = scmp.eq.s32.totalorder %s88, 0
    %s91 = sadd.s32 %s90, 1
    %s92 = scalar_select %p89, %s90, %s91
    %p95 = pneg %p89
    %p96 = scmp.eq.s32.totalorder %s12, 1
    %p97 = por %p95, %p96
    %p98 = scmp.ne.s32.totalorder %s90, %s93
    %p99 = scmp.eq.s32.totalorder %s12, 0
    %p100 = por %p98, %p99
    %p101 = scmp.ne.s32.totalorder %s90, %s93
    %p102 = scmp.eq.s32.totalorder %s17, 1
    %p103 = por %p101, %p102
    %p104 = scmp.ne.s32.totalorder %s93, %s94
    %p105 = scmp.eq.s32.totalorder %s17, 0
    %p106 = por %p104, %p105
    %p107 = scmp.ne.s32.totalorder %s93, %s94
    %p108 = scmp.eq.s32.totalorder %s18, 1
    %p109 = por %p107, %p108
    %p111 = scmp.ne.s32.totalorder %s94, %s110
    %p112 = scmp.eq.s32.totalorder %s18, 0
    %p113 = por %p111, %p112
    %s115 = sadd.s32 %s114, 1
    %p118 = scmp.eq.s32.totalorder %s12, 1
    %p119 = scmp.ne.s32.totalorder %s114, %s116
    %p120 = scmp.eq.s32.totalorder %s12, 0
    %p121 = por %p119, %p120
    %p122 = scmp.ne.s32.totalorder %s114, %s116
    %p123 = scmp.eq.s32.totalorder %s17, 1
    %p124 = por %p122, %p123
    %p125 = scmp.ne.s32.totalorder %s116, %s117
    %p126 = scmp.eq.s32.totalorder %s17, 0
    %p127 = por %p125, %p126
    %p128 = scmp.ne.s32.totalorder %s116, %s117
    %p129 = scmp.eq.s32.totalorder %s18, 1
    %p130 = por %p128, %p129
    %p132 = scmp.ne.s32.totalorder %s117, %s131
    %p133 = scmp.eq.s32.totalorder %s18, 0
    %p134 = por %p132, %p133
    %s136 = sadd.s32 %s135, 1
    %p139 = scmp.eq.s32.totalorder %s12, 1
    %p140 = scmp.ne.s32.totalorder %s135, %s137
    %p141 = scmp.eq.s32.totalorder %s12, 0
    %p142 = por %p140, %p141
    %p143 = scmp.ne.s32.totalorder %s135, %s137
    %p144 = scmp.eq.s32.totalorder %s17, 1
    %p145 = por %p143, %p144
    %p146 = scmp.ne.s32.totalorder %s137, %s138
    %p147 = scmp.eq.s32.totalorder %s17, 0
    %p148 = por %p146, %p147
    %p149 = scmp.ne.s32.totalorder %s137, %s138
    %p150 = scmp.eq.s32.totalorder %s18, 1
    %p151 = por %p149, %p150
    %p153 = scmp.ne.s32.totalorder %s138, %s152
    %p154 = scmp.eq.s32.totalorder %s18, 0
    %p155 = por %p153, %p154
    %s156 = ssub.s32 %s12, %s19
    %p157 = scmp.eq.s32.totalorder %s156, 0
    %s159 = sadd.s32 %s158, 1
    %s160 = scalar_select %p157, %s158, %s159
    %p163 = pneg %p157
    %p164 = scmp.eq.s32.totalorder %s12, 1
    %p165 = por %p163, %p164
    %p166 = scmp.ne.s32.totalorder %s158, %s161
    %p167 = scmp.eq.s32.totalorder %s12, 0
    %p168 = por %p166, %p167
    %p169 = scmp.ne.s32.totalorder %s158, %s161
    %p170 = scmp.eq.s32.totalorder %s17, 1
    %p171 = por %p169, %p170
    %p172 = scmp.ne.s32.totalorder %s161, %s162
    %p173 = scmp.eq.s32.totalorder %s17, 0
    %p174 = por %p172, %p173
    %p175 = scmp.ne.s32.totalorder %s161, %s162
    %p176 = scmp.eq.s32.totalorder %s18, 1
    %p177 = por %p175, %p176
    %p179 = scmp.ne.s32.totalorder %s162, %s178
    %p180 = scmp.eq.s32.totalorder %s18, 0
    %p181 = por %p179, %p180
    %p182 = scmp.le.s32.totalorder 1, %s12
    %p183 = scmp.lt.s32.totalorder %s12, 3
    %p184 = pnand %p182, %p183
    %p185 = pneg %p184
    // Predicated region
    $region9: #{bert_sentiment_forward.14} parent=5 // pred_check
      _
    $region10: #{bert_sentiment_forward.14} parent=5 // pred_check_branch
      %187 = sbr.rel (%p184) target = $region12
    $region11: #{bert_sentiment_forward.14} parent=5 // pred_region
      %s188 = ssub.s32 %s12, 1
      // Predicated region
      $region13: #{bert_sentiment_forward.14} parent=11 // pred_check
        %p189 = pneg %p59
      $region14: #{bert_sentiment_forward.14} parent=11 // pred_check_branch
        %191 = sbr.rel (%p189) target = $region16
      $region15: #{bert_sentiment_forward.14} parent=11 // pred_region
        _
      $region16: #{bert_sentiment_forward.14} parent=11 // pred_fallthru
        _
      // Predicated region
      $region17: #{bert_sentiment_forward.14} parent=11 // pred_check
        %p192 = pneg %p80
      $region18: #{bert_sentiment_forward.14} parent=11 // pred_check_branch
        %194 = sbr.rel (%p192) target = $region20
      $region19: #{bert_sentiment_forward.14} parent=11 // pred_region
        _
      $region20: #{bert_sentiment_forward.14} parent=11 // pred_fallthru
        _
      // Predicated region
      $region21: #{bert_sentiment_forward.14} parent=11 // pred_check
        %p195 = pneg %p127
      $region22: #{bert_sentiment_forward.14} parent=11 // pred_check_branch
        %197 = sbr.rel (%p195) target = $region24
      $region23: #{bert_sentiment_forward.14} parent=11 // pred_region
        _
      $region24: #{bert_sentiment_forward.14} parent=11 // pred_fallthru
        _
      // Predicated region
      $region25: #{bert_sentiment_forward.14} parent=11 // pred_check
        %p198 = pneg %p148
      $region26: #{bert_sentiment_forward.14} parent=11 // pred_check_branch
        %200 = sbr.rel (%p198) target = $region28
      $region27: #{bert_sentiment_forward.14} parent=11 // pred_region
        _
      $region28: #{bert_sentiment_forward.14} parent=11 // pred_fallthru
        _
    $region12: #{bert_sentiment_forward.14} parent=5 // pred_fallthru
      _
    %p201 = scmp.lt.s32.totalorder %s12, 2
    // Predicated region
    $region29: #{bert_sentiment_forward.14} parent=5 // pred_check
      %p202 = pneg %p201
    $region30: #{bert_sentiment_forward.14} parent=5 // pred_check_branch
      %204 = sbr.rel (%p202) target = $region32
    $region31: #{bert_sentiment_forward.14} parent=5 // pred_region
      // Predicated region
      $region33: #{bert_sentiment_forward.14} parent=31 // pred_check
        %p205 = pneg %p32
      $region34: #{bert_sentiment_forward.14} parent=31 // pred_check_branch
        %207 = sbr.rel (%p205) target = $region36
      $region35: #{bert_sentiment_forward.14} parent=31 // pred_region
        %p208 = scmp.lt.s32.totalorder %s12, 1
        %s209 = scalar_select %p208, %s12, 1
        %s210 = smul.addr %s209, 4
        %s211 = scalar_lea.vmem %s0, %s210
      $region36: #{bert_sentiment_forward.14} parent=31 // pred_fallthru
        _
      // Predicated region
      $region37: #{bert_sentiment_forward.14} parent=31 // pred_check
        %p212 = pneg %p100
      $region38: #{bert_sentiment_forward.14} parent=31 // pred_check_branch
        %214 = sbr.rel (%p212) target = $region40
      $region39: #{bert_sentiment_forward.14} parent=31 // pred_region
        %p215 = scmp.lt.s32.totalorder %s12, 1
        %s216 = scalar_select %p215, %s12, 1
        %s217 = smul.addr %s216, 4
        %s218 = scalar_lea.vmem %s3, %s217
      $region40: #{bert_sentiment_forward.14} parent=31 // pred_fallthru
        _
    $region32: #{bert_sentiment_forward.14} parent=5 // pred_fallthru
      _
    %p219 = scmp.le.s32.totalorder 1, %s12
    %p220 = scmp.lt.s32.totalorder %s12, 3
    %p221 = pnand %p219, %p220
    %p222 = pneg %p221
    // Predicated region
    $region41: #{bert_sentiment_forward.14} parent=5 // pred_check
      _
    $region42: #{bert_sentiment_forward.14} parent=5 // pred_check_branch
      %224 = sbr.rel (%p221) target = $region44
    $region43: #{bert_sentiment_forward.14} parent=5 // pred_region
      %s225 = ssub.s32 %s12, 1
      %p226 = scmp.lt.s32.totalorder %s17, 1
      %s227 = scalar_select %p226, %s17, 1
      %s228 = smul.addr %s227, 4
      %s229 = scalar_lea.vmem %s0, %s228
      %p230 = pneg %p38
      %p231 = pneg %p35
      %p232 = pneg %p59
      %p233 = pneg %p56
      %p234 = pneg %p80
      %p235 = pneg %p77
      %p236 = scmp.lt.s32.totalorder %s17, 1
      %s237 = scalar_select %p236, %s17, 1
      %s238 = smul.addr %s237, 4
      %s239 = scalar_lea.vmem %s3, %s238
      %p240 = pneg %p106
      %p241 = pneg %p103
      %p242 = pneg %p127
      %p243 = pneg %p124
      %p244 = pneg %p148
      %p245 = pneg %p145
      %p246 = pneg %p174
      %p247 = pneg %p171
      %p248 = scmp.lt.s32.totalorder %s17, 1
      %s249 = scalar_select %p248, %s17, 1
      %s250 = smul.addr %s249, 4
      %s251 = scalar_lea.vmem %s6, %s250
      %p252 = scmp.lt.s32.totalorder %s17, 1
      %s253 = scalar_select %p252, %s17, 1
      %s254 = smul.addr %s253, 4
      %s255 = scalar_lea.vmem %s0, %s254
      %p256 = scmp.lt.s32.totalorder %s17, 1
      %s257 = scalar_select %p256, %s17, 1
      %s258 = smul.addr %s257, 4
      %s259 = scalar_lea.vmem %s3, %s258
      %p260 = scmp.lt.s32.totalorder %s17, 1
      %s261 = scalar_select %p260, %s17, 1
      %s262 = smul.addr %s261, 4
      %s263 = scalar_lea.vmem %s6, %s262
      %v265 = vld [vmem:[%s255] sm:$0xf]
      %v266 = vld [vmem:[%s1] sm:$0xf]
      %v267 = vld [vmem:[%s1 + $0x4] sm:$0xf]
      %v268 = vld [vmem:[%s1 + $0x8] sm:$0xf]
      %v269 = vld [vmem:[%s1 + $0xc] sm:$0xf]
      %v270 = vld [vmem:[%s2] sm:$0x1]
      %v272 = vperm.slane %v270, 0
      %v278 = vunpack.c.l.b16 %v266
      %v279 = vunpack.c.l.b16 %v267
      %v280 = vunpack.c.l.b16 %v268
      %v281 = vunpack.c.l.b16 %v269
      %v282 = vpack.c.b16 %v279, %v278
      %v283 = vpack.c.b16 %v281, %v280
      %vm286 = vcmask 261120
      %v288 = vsel %vm286, %v265, 0
      %290 = vmatpush.bf16.msra.mxu0 0
      %291 = vmatpush.bf16.msra.mxu0 0
      %292 = vmatpush.bf16.msra.mxu0 0
      %293 = vmatpush.bf16.msra.mxu0 0
      %294 = vmatpush.bf16.msra.mxu0 0
      %295 = vmatpush.bf16.msra.mxu0 0
      %296 = vmatpush.bf16.msra.mxu0 %v283
      %297 = vmatpush.bf16.msra.mxu0 %v282
      %298 = vmatmul.bf16.gmra.mxu0 %v288
      %v299 = vpop.f32.mrf.mxu0
      %v300 = vadd.f32 %v272, %v299
      %v301 = vpop.f32.mrf.mxu0
      %302 = vdwg.mxu0
      %v303 = vld [vmem:[%s259] sm:$0xf]
      %v304 = vunpack.c.l.bf16 %v303
      %v305 = vadd.f32 %v300, %v304
      %v306 = vld [vmem:[%s4] sm:$0x1]
      %v307 = vld [vmem:[%s5] sm:$0x1]
      %v308 = vsel %vm286, %v305, 0.0
      %309 = vadd.xlane.f32.xlu0 %v308
      %v310 = vpop.xlane.xlu0 %309
      %v311 = vrcp.pop 32.0
      %v312 = vmul.f32 32.0, %v311
      %v313 = vsub.f32 1.0, %v312
      %v314 = vmul.f32 %v311, %v313
      %v315 = vadd.f32 %v311, %v314
      %vm316 = vweird.f32 %v311
      %v317 = vsel %vm316, %v311, %v315
      %v318 = vmul.f32 %v310, %v317
      %v319 = vsub.f32 %v305, %v318
      %v320 = vmul.f32 %v319, %v319
      %v321 = vsel %vm286, %v320, 0.0
      %322 = vadd.xlane.f32.xlu0 %v321
      %v323 = vpop.xlane.xlu0 %322
      %v324 = vmul.f32 %v323, %v317
      %v325 = vadd.f32 %v324, 1e-12
      %v326 = vrsqrt.pop %v325
      %v327 = vmul.f32 %v326, %v325
      %v328 = vmul.f32 %v327, %v326
      %v329 = vmul.f32 0.5, %v328
      %v330 = vsub.f32 1.5, %v329
      %v331 = vmul.f32 %v326, %v330
      %vm332 = vweird.f32 %v325
      %vm333 = vweird.f32 %v326
      %vm334 = vmor %vm332, %vm333
      %v335 = vsel %vm334, %v326, %v331
      %v336 = vmul.f32 %v319, %v335
      %v338 = vperm.slane %v306, 0
      %v340 = vmul.f32 %v336, %v338
      %v342 = vperm.slane %v307, 0
      %v344 = vadd.f32 %v340, %v342
      %v345 = vpack.c.bf16 %v344, %v344
      %vm346 = vcmask 257024
      %347 = vst.msk [vmem:[%s263] sm:$0xf] %vm346, %v345
      %p348 = scmp.lt.s32.totalorder %s17, 1
      %s349 = scalar_select %p348, %s17, 1
      %s350 = smul.addr %s349, 4
      %s351 = scalar_lea.vmem %s6, %s350
      // Predicated region
      $region45: #{bert_sentiment_forward.14} parent=43 // pred_check
        %p352 = pneg %p171
      $region46: #{bert_sentiment_forward.14} parent=43 // pred_check_branch
        %354 = sbr.rel (%p352) target = $region48
      $region47: #{bert_sentiment_forward.14} parent=43 // pred_region
        _
      $region48: #{bert_sentiment_forward.14} parent=43 // pred_fallthru
        _
    $region44: #{bert_sentiment_forward.14} parent=5 // pred_fallthru
      _
    %p355 = scmp.le.s32.totalorder 2, %s12
    // Predicated region
    $region49: #{bert_sentiment_forward.14} parent=5 // pred_check
      %p356 = pneg %p355
    $region50: #{bert_sentiment_forward.14} parent=5 // pred_check_branch
      %358 = sbr.rel (%p356) target = $region52
    $region51: #{bert_sentiment_forward.14} parent=5 // pred_region
      %s359 = ssub.s32 %s12, 2
      // Predicated region
      $region53: #{bert_sentiment_forward.14} parent=51 // pred_check
        %p360 = pneg %p177
      $region54: #{bert_sentiment_forward.14} parent=51 // pred_check_branch
        %362 = sbr.rel (%p360) target = $region56
      $region55: #{bert_sentiment_forward.14} parent=51 // pred_region
        %p363 = scmp.lt.s32.totalorder %s18, 1
        %s364 = scalar_select %p363, %s18, 1
        %s365 = smul.addr %s364, 4
        %s366 = scalar_lea.vmem %s6, %s365
      $region56: #{bert_sentiment_forward.14} parent=51 // pred_fallthru
        _
    $region52: #{bert_sentiment_forward.14} parent=5 // pred_fallthru
      _
  $region6: #{bert_sentiment_forward.14} parent=0 // loop_footer
    %s16 = sadd.s32 1, %s12
  $region7: #{bert_sentiment_forward.14} parent=0 // loop_footer_branch
    %11 = sbr.rel target = $region3
  $region8: #{bert_sentiment_forward.14} parent=0 // loop_exit
    _

// kernel: bert_sentiment_forward.13
$region0: #{bert_sentiment_forward.13}
  #allocation0 [shape = 'u32[]', space=smem, size = 0x4, offset = 0x4, fixed_abs, tag = 'smem constant byte address 0x4 - core index']
  #allocation1 [shape = 'u32[72,128]{1,0:T(1,128)}', space=vmem, size = 0x9000, scoped, tag = 'internal scratch']
  %s0 = inlined_call_operand.vmem [shape: bf16[2,8,96], index: 0, kind: input, shape index: {}]
  %s1 = inlined_call_operand.vmem [shape: f32[2,1,8], index: 1, kind: input, shape index: {}]
  %s2 = inlined_call_operand.vmem [shape: bf16[2,8,32], index: 2, kind: output, shape index: {}]
  %s3 = sld [smem:[#allocation0]]
  $region41: #{bert_sentiment_forward.13} parent=0
    _
  %s5 = ssub.s32 1, %s3
  %s6 = scalar_select 0, %s5, %s3
  loop: start=0, step=1, limit=4
  $region2: #{bert_sentiment_forward.13} parent=0 // loop_pre_header
    _
  $region3: #{bert_sentiment_forward.13} parent=0 // loop_header
    %s8 = sphi 0, %s12
    %p9 = scmp.ge.s32.totalorder %s8, 4
    %s15 = sphi 0, %s27
    %s16 = sphi 0, %s23
    %s17 = sphi 0, %s15
    %s18 = sphi 0, %s16
    %s19 = sphi 0, %s17
    %s20 = sphi 0, %s18
    %s32 = sphi 0, %s34
    %s35 = sphi 0, %s32
    %s36 = sphi 0, %s35
    %s52 = sphi 0, %s36
    %s58 = sphi 0, %s60
    %s61 = sphi 0, %s58
    %s62 = sphi 0, %s61
    %s78 = sphi 0, %s62
    %s86 = sphi 0, %s88
    %s89 = sphi 0, %s86
    %s90 = sphi 0, %s89
    %s106 = sphi 0, %s90
  $region4: #{bert_sentiment_forward.13} parent=0 // loop_header_branch
    %11 = sbr.rel (%p9) target = $region8
  $region5: #{bert_sentiment_forward.13} parent=0 // loop_body
    %s13 = ssub.s32 %s8, 1
    %s14 = ssub.s32 %s8, 2
    %s21 = sadd.s32 1, %s16
    %p22 = scmp.ge.s32.totalorder %s21, 1
    %s23 = scalar_select %p22, 0, %s21
    %s24 = sadd.s32 1, %s15
    %s25 = scalar_select %p22, %s24, %s15
    %p26 = scmp.ge.s32.totalorder %s25, 2
    %s27 = scalar_select %p26, 0, %s25
    %s28 = ssub.s32 %s15, %s27
    %s29 = ssub.s32 %s16, %s23
    %s30 = sor.u32 %s28, %s29
    %p31 = scmp.eq.s32.totalorder %s30, 0
    %s33 = sadd.s32 %s32, 1
    %s34 = scalar_select %p31, %s32, %s33
    %p37 = pneg %p31
    %p38 = scmp.eq.s32.totalorder %s8, 1
    %p39 = por %p37, %p38
    %p40 = scmp.ne.s32.totalorder %s32, %s35
    %p41 = scmp.eq.s32.totalorder %s8, 0
    %p42 = por %p40, %p41
    %p43 = scmp.ne.s32.totalorder %s32, %s35
    %p44 = scmp.eq.s32.totalorder %s13, 1
    %p45 = por %p43, %p44
    %p46 = scmp.ne.s32.totalorder %s35, %s36
    %p47 = scmp.eq.s32.totalorder %s13, 0
    %p48 = por %p46, %p47
    %p49 = scmp.ne.s32.totalorder %s35, %s36
    %p50 = scmp.eq.s32.totalorder %s14, 1
    %p51 = por %p49, %p50
    %p53 = scmp.ne.s32.totalorder %s36, %s52
    %p54 = scmp.eq.s32.totalorder %s14, 0
    %p55 = por %p53, %p54
    %s56 = ssub.s32 %s15, %s27
    %p57 = scmp.eq.s32.totalorder %s56, 0
    %s59 = sadd.s32 %s58, 1
    %s60 = scalar_select %p57, %s58, %s59
    %p63 = pneg %p57
    %p64 = scmp.eq.s32.totalorder %s8, 1
    %p65 = por %p63, %p64
    %p66 = scmp.ne.s32.totalorder %s58, %s61
    %p67 = scmp.eq.s32.totalorder %s8, 0
    %p68 = por %p66, %p67
    %p69 = scmp.ne.s32.totalorder %s58, %s61
    %p70 = scmp.eq.s32.totalorder %s13, 1
    %p71 = por %p69, %p70
    %p72 = scmp.ne.s32.totalorder %s61, %s62
    %p73 = scmp.eq.s32.totalorder %s13, 0
    %p74 = por %p72, %p73
    %p75 = scmp.ne.s32.totalorder %s61, %s62
    %p76 = scmp.eq.s32.totalorder %s14, 1
    %p77 = por %p75, %p76
    %p79 = scmp.ne.s32.totalorder %s62, %s78
    %p80 = scmp.eq.s32.totalorder %s14, 0
    %p81 = por %p79, %p80
    %s82 = ssub.s32 %s15, %s27
    %s83 = ssub.s32 %s16, %s23
    %s84 = sor.u32 %s82, %s83
    %p85 = scmp.eq.s32.totalorder %s84, 0
    %s87 = sadd.s32 %s86, 1
    %s88 = scalar_select %p85, %s86, %s87
    %p91 = pneg %p85
    %p92 = scmp.eq.s32.totalorder %s8, 1
    %p93 = por %p91, %p92
    %p94 = scmp.ne.s32.totalorder %s86, %s89
    %p95 = scmp.eq.s32.totalorder %s8, 0
    %p96 = por %p94, %p95
    %p97 = scmp.ne.s32.totalorder %s86, %s89
    %p98 = scmp.eq.s32.totalorder %s13, 1
    %p99 = por %p97, %p98
    %p100 = scmp.ne.s32.totalorder %s89, %s90
    %p101 = scmp.eq.s32.totalorder %s13, 0
    %p102 = por %p100, %p101
    %p103 = scmp.ne.s32.totalorder %s89, %s90
    %p104 = scmp.eq.s32.totalorder %s14, 1
    %p105 = por %p103, %p104
    %p107 = scmp.ne.s32.totalorder %s90, %s106
    %p108 = scmp.eq.s32.totalorder %s14, 0
    %p109 = por %p107, %p108
    %p110 = scmp.le.s32.totalorder 1, %s8
    %p111 = scmp.lt.s32.totalorder %s8, 3
    %p112 = pnand %p110, %p111
    %p113 = pneg %p112
    // Predicated region
    $region9: #{bert_sentiment_forward.13} parent=5 // pred_check
      _
    $region10: #{bert_sentiment_forward.13} parent=5 // pred_check_branch
      %115 = sbr.rel (%p112) target = $region12
    $region11: #{bert_sentiment_forward.13} parent=5 // pred_region
      %s116 = ssub.s32 %s8, 1
    $region12: #{bert_sentiment_forward.13} parent=5 // pred_fallthru
      _
    %p117 = scmp.lt.s32.totalorder %s8, 2
    // Predicated region
    $region13: #{bert_sentiment_forward.13} parent=5 // pred_check
      %p118 = pneg %p117
    $region14: #{bert_sentiment_forward.13} parent=5 // pred_check_branch
      %120 = sbr.rel (%p118) target = $region16
    $region15: #{bert_sentiment_forward.13} parent=5 // pred_region
      // Predicated region
      $region17: #{bert_sentiment_forward.13} parent=15 // pred_check
        %p121 = pneg %p42
      $region18: #{bert_sentiment_forward.13} parent=15 // pred_check_branch
        %123 = sbr.rel (%p121) target = $region20
      $region19: #{bert_sentiment_forward.13} parent=15 // pred_region
        %p124 = scmp.lt.s32.totalorder %s15, 1
        %s125 = scalar_select %p124, %s15, 1
        %p126 = scmp.lt.s32.totalorder %s16, 0
        %s127 = scalar_select %p126, %s16, 0
        %s128 = sadd.s32 %s127, %s125
        %s129 = smul.addr %s128, 4
        %s130 = scalar_lea.vmem %s0, %s129
      $region20: #{bert_sentiment_forward.13} parent=15 // pred_fallthru
        _
      // Predicated region
      $region21: #{bert_sentiment_forward.13} parent=15 // pred_check
        %p131 = pneg %p68
      $region22: #{bert_sentiment_forward.13} parent=15 // pred_check_branch
        %133 = sbr.rel (%p131) target = $region24
      $region23: #{bert_sentiment_forward.13} parent=15 // pred_region
        %p134 = scmp.lt.s32.totalorder %s15, 1
        %s135 = scalar_select %p134, %s15, 1
        %s136 = scalar_lea.vmem %s1, %s135
      $region24: #{bert_sentiment_forward.13} parent=15 // pred_fallthru
        _
    $region16: #{bert_sentiment_forward.13} parent=5 // pred_fallthru
      _
    %p137 = scmp.le.s32.totalorder 1, %s8
    %p138 = scmp.lt.s32.totalorder %s8, 3
    %p139 = pnand %p137, %p138
    %p140 = pneg %p139
    // Predicated region
    $region25: #{bert_sentiment_forward.13} parent=5 // pred_check
      _
    $region26: #{bert_sentiment_forward.13} parent=5 // pred_check_branch
      %142 = sbr.rel (%p139) target = $region28
    $region27: #{bert_sentiment_forward.13} parent=5 // pred_region
      %s143 = ssub.s32 %s8, 1
      %p144 = scmp.lt.s32.totalorder %s17, 1
      %s145 = scalar_select %p144, %s17, 1
      %p146 = scmp.lt.s32.totalorder %s18, 0
      %s147 = scalar_select %p146, %s18, 0
      %s148 = sadd.s32 %s147, %s145
      %s149 = smul.addr %s148, 4
      %s150 = scalar_lea.vmem %s0, %s149
      %p151 = pneg %p48
      %p152 = pneg %p45
      %p153 = scmp.lt.s32.totalorder %s17, 1
      %s154 = scalar_select %p153, %s17, 1
      %s155 = scalar_lea.vmem %s1, %s154
      %p156 = pneg %p74
      %p157 = pneg %p71
      %p158 = pneg %p102
      %p159 = pneg %p99
      %p160 = scmp.lt.s32.totalorder %s17, 1
      %s161 = scalar_select %p160, %s17, 1
      %p162 = scmp.lt.s32.totalorder %s18, 0
      %s163 = scalar_select %p162, %s18, 0
      %s164 = sadd.s32 %s163, %s161
      %s165 = smul.addr %s164, 4
      %s166 = scalar_lea.vmem %s2, %s165
      %p167 = scmp.lt.s32.totalorder %s17, 1
      %s168 = scalar_select %p167, %s17, 1
      %p169 = scmp.lt.s32.totalorder %s18, 0
      %s170 = scalar_select %p169, %s18, 0
      %s171 = sadd.s32 %s170, %s168
      %s172 = smul.addr %s171, 4
      %s173 = scalar_lea.vmem %s0, %s172
      %p174 = scmp.lt.s32.totalorder %s17, 1
      %s175 = scalar_select %p174, %s17, 1
      %s176 = scalar_lea.vmem %s1, %s175
      %p177 = scmp.lt.s32.totalorder %s17, 1
      %s178 = scalar_select %p177, %s17, 1
      %p179 = scmp.lt.s32.totalorder %s18, 0
      %s180 = scalar_select %p179, %s18, 0
      %s181 = sadd.s32 %s180, %s178
      %s182 = smul.addr %s181, 4
      %s183 = scalar_lea.vmem %s2, %s182
      %v185 = vld [vmem:[%s173] sm:$0xf]
      %v186 = vld [vmem:[%s176] sm:$0x1]
      %v188 = vperm.slane %v186, 0
      %v191 = vunpack.c.l.b16 %v185
      %v192 = vpack.c.b16 %v191, %v191
      %193 = vrot.lane.b32.xlu0 %v192, 96
      %v194 = vpop.permute.xlu0 %193
      %vm195 = vcmask 64512
      %v197 = vsel %vm195, %v185, 0
      %v200 = vsel %vm195, %v194, 0
      %202 = vmatpush.bf16.xpose.msra.mxu0 0
      %203 = vmatpush.bf16.xpose.msra.mxu0 0
      %204 = vmatpush.bf16.xpose.msra.mxu0 0
      %205 = vmatpush.bf16.xpose.msra.mxu0 0
      %206 = vmatpush.bf16.xpose.msra.mxu0 0
      %207 = vmatpush.bf16.xpose.msra.mxu0 0
      %208 = vmatpush.bf16.xpose.msra.mxu0 0
      %209 = vmatpush.bf16.xpose.msra.mxu0 %v200
      %210 = vmatmul.bf16.gmra.mxu0 %v197
      %v211 = vpop.f32.mrf.mxu0
      %v212 = vadd.f32 %v188, %v211
      %v213 = vpop.f32.mrf.mxu0
      %214 = vdwg.mxu0
      %v215 = vsel %vm195, %v212, -inf
      %216 = vmax.xlane.f32.xlu0 %v215
      %v217 = vpop.xlane.xlu0 %216
      %v218 = vsub.f32 %v212, %v217
      %v219 = vmul.f32 %v218, 1.442695
      %v220 = vpow.pop %v219
      %v221 = vsel %vm195, %v220, 0.0
      %222 = vadd.xlane.f32.xlu0 %v221
      %v223 = vpop.xlane.xlu0 %222
      %v224 = vrcp.pop %v223
      %v225 = vmul.f32 %v220, %v224
      %v226 = vpack.c.bf16 %v225, %v225
      %227 = vrot.lane.b32.xlu0 %v192, 64
      %v228 = vpop.permute.xlu0 %227
      %v230 = vsel %vm195, %v226, 0
      %vm232 = vcmask 1043456
      %v234 = vsel %vm232, %v228, 0
      %236 = vmatpush.bf16.msra.mxu0 0
      %237 = vmatpush.bf16.msra.mxu0 0
      %238 = vmatpush.bf16.msra.mxu0 0
      %239 = vmatpush.bf16.msra.mxu0 0
      %240 = vmatpush.bf16.msra.mxu0 0
      %241 = vmatpush.bf16.msra.mxu0 0
      %242 = vmatpush.bf16.msra.mxu0 0
      %243 = vmatpush.bf16.msra.mxu0 %v234
      %244 = vmatmul.bf16.gmra.mxu0 %v230
      %v245 = vpop.f32.mrf.mxu0
      %v246 = vadd.f32 0.0, %v245
      %v247 = vpop.f32.mrf.mxu0
      %248 = vdwg.mxu0
      %v249 = vpack.c.bf16 %v246, %v246
      %vm250 = vcmask 60416
      %251 = vst.msk [vmem:[%s183] sm:$0xf] %vm250, %v249
      %252 = vrot.lane.b32.xlu0 %v192, 120
      %v253 = vpop.permute.xlu0 %252
      %254 = vrot.lane.b32.xlu0 %v192, 88
      %v255 = vpop.permute.xlu0 %254
      %v257 = vsel %vm195, %v253, 0
      %v260 = vsel %vm195, %v255, 0
      %262 = vmatpush.bf16.xpose.msra.mxu0 0
      %263 = vmatpush.bf16.xpose.msra.mxu0 0
      %264 = vmatpush.bf16.xpose.msra.mxu0 0
      %265 = vmatpush.bf16.xpose.msra.mxu0 0
      %266 = vmatpush.bf16.xpose.msra.mxu0 0
      %267 = vmatpush.bf16.xpose.msra.mxu0 0
      %268 = vmatpush.bf16.xpose.msra.mxu0 0
      %269 = vmatpush.bf16.xpose.msra.mxu0 %v260
      %270 = vmatmul.bf16.gmra.mxu0 %v257
      %v271 = vpop.f32.mrf.mxu0
      %v272 = vadd.f32 %v188, %v271
      %v273 = vpop.f32.mrf.mxu0
      %274 = vdwg.mxu0
      %v275 = vsel %vm195, %v272, -inf
      %276 = vmax.xlane.f32.xlu0 %v275
      %v277 = vpop.xlane.xlu0 %276
      %v278 = vsub.f32 %v272, %v277
      %v279 = vmul.f32 %v278, 1.442695
      %v280 = vpow.pop %v279
      %v281 = vsel %vm195, %v280, 0.0
      %282 = vadd.xlane.f32.xlu0 %v281
      %v283 = vpop.xlane.xlu0 %282
      %v284 = vrcp.pop %v283
      %v285 = vmul.f32 %v280, %v284
      %v286 = vpack.c.bf16 %v285, %v285
      %287 = vrot.lane.b32.xlu0 %v192, 56
      %v288 = vpop.permute.xlu0 %287
      %v290 = vsel %vm195, %v286, 0
      %v293 = vsel %vm232, %v288, 0
      %295 = vmatpush.bf16.msra.mxu0 0
      %296 = vmatpush.bf16.msra.mxu0 0
      %297 = vmatpush.bf16.msra.mxu0 0
      %298 = vmatpush.bf16.msra.mxu0 0
      %299 = vmatpush.bf16.msra.mxu0 0
      %300 = vmatpush.bf16.msra.mxu0 0
      %301 = vmatpush.bf16.msra.mxu0 0
      %302 = vmatpush.bf16.msra.mxu0 %v293
      %303 = vmatmul.bf16.gmra.mxu0 %v290
      %v304 = vpop.f32.mrf.mxu0
      %v305 = vadd.f32 0.0, %v304
      %v306 = vpop.f32.mrf.mxu0
      %307 = vdwg.mxu0
      %v308 = vpack.c.bf16 %v305, %v305
      %310 = vrot.lane.b32.xlu0 %v308, 8
      %v311 = vpop.permute.xlu0 %310
      %vm313 = vcmask 126016
      %314 = vst.msk [vmem:[%s183] sm:$0xf] %vm313, %v311
      %315 = vrot.lane.b32.xlu0 %v192, 112
      %v316 = vpop.permute.xlu0 %315
      %317 = vrot.lane.b32.xlu0 %v192, 80
      %v318 = vpop.permute.xlu0 %317
      %v320 = vsel %vm195, %v316, 0
      %v323 = vsel %vm195, %v318, 0
      %325 = vmatpush.bf16.xpose.msra.mxu0 0
      %326 = vmatpush.bf16.xpose.msra.mxu0 0
      %327 = vmatpush.bf16.xpose.msra.mxu0 0
      %328 = vmatpush.bf16.xpose.msra.mxu0 0
      %329 = vmatpush.bf16.xpose.msra.mxu0 0
      %330 = vmatpush.bf16.xpose.msra.mxu0 0
      %331 = vmatpush.bf16.xpose.msra.mxu0 0
      %332 = vmatpush.bf16.xpose.msra.mxu0 %v323
      %333 = vmatmul.bf16.gmra.mxu0 %v320
      %v334 = vpop.f32.mrf.mxu0
      %v335 = vadd.f32 %v188, %v334
      %v336 = vpop.f32.mrf.mxu0
      %337 = vdwg.mxu0
      %v338 = vsel %vm195, %v335, -inf
      %339 = vmax.xlane.f32.xlu0 %v338
      %v340 = vpop.xlane.xlu0 %339
      %v341 = vsub.f32 %v335, %v340
      %v342 = vmul.f32 %v341, 1.442695
      %v343 = vpow.pop %v342
      %v344 = vsel %vm195, %v343, 0.0
      %345 = vadd.xlane.f32.xlu0 %v344
      %v346 = vpop.xlane.xlu0 %345
      %v347 = vrcp.pop %v346
      %v348 = vmul.f32 %v343, %v347
      %v349 = vpack.c.bf16 %v348, %v348
      %350 = vrot.lane.b32.xlu0 %v192, 48
      %v351 = vpop.permute.xlu0 %350
      %v353 = vsel %vm195, %v349, 0
      %v356 = vsel %vm232, %v351, 0
      %358 = vmatpush.bf16.msra.mxu0 0
      %359 = vmatpush.bf16.msra.mxu0 0
      %360 = vmatpush.bf16.msra.mxu0 0
      %361 = vmatpush.bf16.msra.mxu0 0
      %362 = vmatpush.bf16.msra.mxu0 0
      %363 = vmatpush.bf16.msra.mxu0 0
      %364 = vmatpush.bf16.msra.mxu0 0
      %365 = vmatpush.bf16.msra.mxu0 %v356
      %366 = vmatmul.bf16.gmra.mxu0 %v353
      %v367 = vpop.f32.mrf.mxu0
      %v368 = vadd.f32 0.0, %v367
      %v369 = vpop.f32.mrf.mxu0
      %370 = vdwg.mxu0
      %v371 = vpack.c.bf16 %v368, %v368
      %373 = vrot.lane.b32.xlu0 %v371, 16
      %v374 = vpop.permute.xlu0 %373
      %vm376 = vcmask 191616
      %377 = vst.msk [vmem:[%s183] sm:$0xf] %vm376, %v374
      %378 = vrot.lane.b32.xlu0 %v192, 104
      %v379 = vpop.permute.xlu0 %378
      %380 = vrot.lane.b32.xlu0 %v192, 72
      %v381 = vpop.permute.xlu0 %380
      %v383 = vsel %vm195, %v379, 0
      %v386 = vsel %vm195, %v381, 0
      %388 = vmatpush.bf16.xpose.msra.mxu0 0
      %389 = vmatpush.bf16.xpose.msra.mxu0 0
      %390 = vmatpush.bf16.xpose.msra.mxu0 0
      %391 = vmatpush.bf16.xpose.msra.mxu0 0
      %392 = vmatpush.bf16.xpose.msra.mxu0 0
      %393 = vmatpush.bf16.xpose.msra.mxu0 0
      %394 = vmatpush.bf16.xpose.msra.mxu0 0
      %395 = vmatpush.bf16.xpose.msra.mxu0 %v386
      %396 = vmatmul.bf16.gmra.mxu0 %v383
      %v397 = vpop.f32.mrf.mxu0
      %v398 = vadd.f32 %v188, %v397
      %v399 = vpop.f32.mrf.mxu0
      %400 = vdwg.mxu0
      %v401 = vsel %vm195, %v398, -inf
      %402 = vmax.xlane.f32.xlu0 %v401
      %v403 = vpop.xlane.xlu0 %402
      %v404 = vsub.f32 %v398, %v403
      %v405 = vmul.f32 %v404, 1.442695
      %v406 = vpow.pop %v405
      %v407 = vsel %vm195, %v406, 0.0
      %408 = vadd.xlane.f32.xlu0 %v407
      %v409 = vpop.xlane.xlu0 %408
      %v410 = vrcp.pop %v409
      %v411 = vmul.f32 %v406, %v410
      %v412 = vpack.c.bf16 %v411, %v411
      %413 = vrot.lane.b32.xlu0 %v192, 40
      %v414 = vpop.permute.xlu0 %413
      %v416 = vsel %vm195, %v412, 0
      %v419 = vsel %vm232, %v414, 0
      %421 = vmatpush.bf16.msra.mxu0 0
      %422 = vmatpush.bf16.msra.mxu0 0
      %423 = vmatpush.bf16.msra.mxu0 0
      %424 = vmatpush.bf16.msra.mxu0 0
      %425 = vmatpush.bf16.msra.mxu0 0
      %426 = vmatpush.bf16.msra.mxu0 0
      %427 = vmatpush.bf16.msra.mxu0 0
      %428 = vmatpush.bf16.msra.mxu0 %v419
      %429 = vmatmul.bf16.gmra.mxu0 %v416
      %v430 = vpop.f32.mrf.mxu0
      %v431 = vadd.f32 0.0, %v430
      %v432 = vpop.f32.mrf.mxu0
      %433 = vdwg.mxu0
      %v434 = vpack.c.bf16 %v431, %v431
      %436 = vrot.lane.b32.xlu0 %v434, 24
      %v437 = vpop.permute.xlu0 %436
      %vm439 = vcmask 257216
      %440 = vst.msk [vmem:[%s183] sm:$0xf] %vm439, %v437
      %p441 = scmp.lt.s32.totalorder %s17, 1
      %s442 = scalar_select %p441, %s17, 1
      %p443 = scmp.lt.s32.totalorder %s18, 0
      %s444 = scalar_select %p443, %s18, 0
      %s445 = sadd.s32 %s444, %s442
      %s446 = smul.addr %s445, 4
      %s447 = scalar_lea.vmem %s2, %s446
      // Predicated region
      $region29: #{bert_sentiment_forward.13} parent=27 // pred_check
        %p448 = pneg %p99
      $region30: #{bert_sentiment_forward.13} parent=27 // pred_check_branch
        %450 = sbr.rel (%p448) target = $region32
      $region31: #{bert_sentiment_forward.13} parent=27 // pred_region
        _
      $region32: #{bert_sentiment_forward.13} parent=27 // pred_fallthru
        _
    $region28: #{bert_sentiment_forward.13} parent=5 // pred_fallthru
      _
    %p451 = scmp.le.s32.totalorder 2, %s8
    // Predicated region
    $region33: #{bert_sentiment_forward.13} parent=5 // pred_check
      %p452 = pneg %p451
    $region34: #{bert_sentiment_forward.13} parent=5 // pred_check_branch
      %454 = sbr.rel (%p452) target = $region36
    $region35: #{bert_sentiment_forward.13} parent=5 // pred_region
      %s455 = ssub.s32 %s8, 2
      // Predicated region
      $region37: #{bert_sentiment_forward.13} parent=35 // pred_check
        %p456 = pneg %p105
      $region38: #{bert_sentiment_forward.13} parent=35 // pred_check_branch
        %458 = sbr.rel (%p456) target = $region40
      $region39: #{bert_sentiment_forward.13} parent=35 // pred_region
        %p459 = scmp.lt.s32.totalorder %s19, 1
        %s460 = scalar_select %p459, %s19, 1
        %p461 = scmp.lt.s32.totalorder %s20, 0
        %s462 = scalar_select %p461, %s20, 0
        %s463 = sadd.s32 %s462, %s460
        %s464 = smul.addr %s463, 4
        %s465 = scalar_lea.vmem %s2, %s464
      $region40: #{bert_sentiment_forward.13} parent=35 // pred_fallthru
        _
    $region36: #{bert_sentiment_forward.13} parent=5 // pred_fallthru
      _
  $region6: #{bert_sentiment_forward.13} parent=0 // loop_footer
    %s12 = sadd.s32 1, %s8
  $region7: #{bert_sentiment_forward.13} parent=0 // loop_footer_branch
    %7 = sbr.rel target = $region3
  $region8: #{bert_sentiment_forward.13} parent=0 // loop_exit
    _

// kernel: bert_sentiment_forward.15
$region0: #{bert_sentiment_forward.15}
  #allocation0 [shape = 'u32[]', space=smem, size = 0x4, offset = 0x4, fixed_abs, tag = 'smem constant byte address 0x4 - core index']
  #allocation1 [shape = 'u32[72,128]{1,0:T(1,128)}', space=vmem, size = 0x9000, scoped, tag = 'internal scratch']
  %s0 = inlined_call_operand.vmem [shape: bf16[16,32], index: 0, kind: input, shape index: {}]
  %s1 = inlined_call_operand.vmem [shape: bf16[32,64], index: 1, kind: input, shape index: {}]
  %s2 = inlined_call_operand.vmem [shape: f32[1,64], index: 2, kind: input, shape index: {}]
  %s3 = inlined_call_operand.vmem [shape: bf16[16,64], index: 3, kind: output, shape index: {}]
  %s4 = sld [smem:[#allocation0]]
  $region45: #{bert_sentiment_forward.15} parent=0
    _
  %s6 = ssub.s32 1, %s4
  %s7 = scalar_select 0, %s6, %s4
  loop: start=0, step=1, limit=4
  $region2: #{bert_sentiment_forward.15} parent=0 // loop_pre_header
    _
  $region3: #{bert_sentiment_forward.15} parent=0 // loop_header
    %s9 = sphi 0, %s13
    %p10 = scmp.ge.s32.totalorder %s9, 4
    %s16 = sphi 0, %s28
    %s17 = sphi 0, %s24
    %s18 = sphi 0, %s16
    %s19 = sphi 0, %s17
    %s20 = sphi 0, %s18
    %s21 = sphi 0, %s19
    %s31 = sphi 0, %s33
    %s34 = sphi 0, %s31
    %s35 = sphi 0, %s34
    %s51 = sphi 0, %s35
    %s57 = sphi 0, %s59
    %s60 = sphi 0, %s57
    %s61 = sphi 0, %s60
    %s77 = sphi 0, %s61
    %s83 = sphi 0, %s85
    %s86 = sphi 0, %s83
    %s87 = sphi 0, %s86
    %s103 = sphi 0, %s87
    %s111 = sphi 0, %s113
    %s114 = sphi 0, %s111
    %s115 = sphi 0, %s114
    %s131 = sphi 0, %s115
  $region4: #{bert_sentiment_forward.15} parent=0 // loop_header_branch
    %12 = sbr.rel (%p10) target = $region8
  $region5: #{bert_sentiment_forward.15} parent=0 // loop_body
    %s14 = ssub.s32 %s9, 1
    %s15 = ssub.s32 %s9, 2
    %s22 = sadd.s32 1, %s17
    %p23 = scmp.ge.s32.totalorder %s22, 1
    %s24 = scalar_select %p23, 0, %s22
    %s25 = sadd.s32 1, %s16
    %s26 = scalar_select %p23, %s25, %s16
    %p27 = scmp.ge.s32.totalorder %s26, 2
    %s28 = scalar_select %p27, 0, %s26
    %s29 = ssub.s32 %s16, %s28
    %p30 = scmp.eq.s32.totalorder %s29, 0
    %s32 = sadd.s32 %s31, 1
    %s33 = scalar_select %p30, %s31, %s32
    %p36 = pneg %p30
    %p37 = scmp.eq.s32.totalorder %s9, 1
    %p38 = por %p36, %p37
    %p39 = scmp.ne.s32.totalorder %s31, %s34
    %p40 = scmp.eq.s32.totalorder %s9, 0
    %p41 = por %p39, %p40
    %p42 = scmp.ne.s32.totalorder %s31, %s34
    %p43 = scmp.eq.s32.totalorder %s14, 1
    %p44 = por %p42, %p43
    %p45 = scmp.ne.s32.totalorder %s34, %s35
    %p46 = scmp.eq.s32.totalorder %s14, 0
    %p47 = por %p45, %p46
    %p48 = scmp.ne.s32.totalorder %s34, %s35
    %p49 = scmp.eq.s32.totalorder %s15, 1
    %p50 = por %p48, %p49
    %p52 = scmp.ne.s32.totalorder %s35, %s51
    %p53 = scmp.eq.s32.totalorder %s15, 0
    %p54 = por %p52, %p53
    %s55 = ssub.s32 %s17, %s24
    %p56 = scmp.eq.s32.totalorder %s55, 0
    %s58 = sadd.s32 %s57, 1
    %s59 = scalar_select %p56, %s57, %s58
    %p62 = pneg %p56
    %p63 = scmp.eq.s32.totalorder %s9, 1
    %p64 = por %p62, %p63
    %p65 = scmp.ne.s32.totalorder %s57, %s60
    %p66 = scmp.eq.s32.totalorder %s9, 0
    %p67 = por %p65, %p66
    %p68 = scmp.ne.s32.totalorder %s57, %s60
    %p69 = scmp.eq.s32.totalorder %s14, 1
    %p70 = por %p68, %p69
    %p71 = scmp.ne.s32.totalorder %s60, %s61
    %p72 = scmp.eq.s32.totalorder %s14, 0
    %p73 = por %p71, %p72
    %p74 = scmp.ne.s32.totalorder %s60, %s61
    %p75 = scmp.eq.s32.totalorder %s15, 1
    %p76 = por %p74, %p75
    %p78 = scmp.ne.s32.totalorder %s61, %s77
    %p79 = scmp.eq.s32.totalorder %s15, 0
    %p80 = por %p78, %p79
    %s81 = ssub.s32 %s17, %s24
    %p82 = scmp.eq.s32.totalorder %s81, 0
    %s84 = sadd.s32 %s83, 1
    %s85 = scalar_select %p82, %s83, %s84
    %p88 = pneg %p82
    %p89 = scmp.eq.s32.totalorder %s9, 1
    %p90 = por %p88, %p89
    %p91 = scmp.ne.s32.totalorder %s83, %s86
    %p92 = scmp.eq.s32.totalorder %s9, 0
    %p93 = por %p91, %p92
    %p94 = scmp.ne.s32.totalorder %s83, %s86
    %p95 = scmp.eq.s32.totalorder %s14, 1
    %p96 = por %p94, %p95
    %p97 = scmp.ne.s32.totalorder %s86, %s87
    %p98 = scmp.eq.s32.totalorder %s14, 0
    %p99 = por %p97, %p98
    %p100 = scmp.ne.s32.totalorder %s86, %s87
    %p101 = scmp.eq.s32.totalorder %s15, 1
    %p102 = por %p100, %p101
    %p104 = scmp.ne.s32.totalorder %s87, %s103
    %p105 = scmp.eq.s32.totalorder %s15, 0
    %p106 = por %p104, %p105
    %s107 = ssub.s32 %s16, %s28
    %s108 = ssub.s32 %s17, %s24
    %s109 = sor.u32 %s107, %s108
    %p110 = scmp.eq.s32.totalorder %s109, 0
    %s112 = sadd.s32 %s111, 1
    %s113 = scalar_select %p110, %s111, %s112
    %p116 = pneg %p110
    %p117 = scmp.eq.s32.totalorder %s9, 1
    %p118 = por %p116, %p117
    %p119 = scmp.ne.s32.totalorder %s111, %s114
    %p120 = scmp.eq.s32.totalorder %s9, 0
    %p121 = por %p119, %p120
    %p122 = scmp.ne.s32.totalorder %s111, %s114
    %p123 = scmp.eq.s32.totalorder %s14, 1
    %p124 = por %p122, %p123
    %p125 = scmp.ne.s32.totalorder %s114, %s115
    %p126 = scmp.eq.s32.totalorder %s14, 0
    %p127 = por %p125, %p126
    %p128 = scmp.ne.s32.totalorder %s114, %s115
    %p129 = scmp.eq.s32.totalorder %s15, 1
    %p130 = por %p128, %p129
    %p132 = scmp.ne.s32.totalorder %s115, %s131
    %p133 = scmp.eq.s32.totalorder %s15, 0
    %p134 = por %p132, %p133
    %p135 = scmp.le.s32.totalorder 1, %s9
    %p136 = scmp.lt.s32.totalorder %s9, 3
    %p137 = pnand %p135, %p136
    %p138 = pneg %p137
    // Predicated region
    $region9: #{bert_sentiment_forward.15} parent=5 // pred_check
      _
    $region10: #{bert_sentiment_forward.15} parent=5 // pred_check_branch
      %140 = sbr.rel (%p137) target = $region12
    $region11: #{bert_sentiment_forward.15} parent=5 // pred_region
      %s141 = ssub.s32 %s9, 1
      // Predicated region
      $region13: #{bert_sentiment_forward.15} parent=11 // pred_check
        %p142 = pneg %p73
      $region14: #{bert_sentiment_forward.15} parent=11 // pred_check_branch
        %144 = sbr.rel (%p142) target = $region16
      $region15: #{bert_sentiment_forward.15} parent=11 // pred_region
        %p145 = scmp.lt.s32.totalorder %s19, 0
        %s146 = scalar_select %p145, %s19, 0
        %s147 = smul.addr %s146, 4
        %s148 = scalar_lea.vmem %s1, %s147
      $region16: #{bert_sentiment_forward.15} parent=11 // pred_fallthru
        _
      // Predicated region
      $region17: #{bert_sentiment_forward.15} parent=11 // pred_check
        %p149 = pneg %p99
      $region18: #{bert_sentiment_forward.15} parent=11 // pred_check_branch
        %151 = sbr.rel (%p149) target = $region20
      $region19: #{bert_sentiment_forward.15} parent=11 // pred_region
        %p152 = scmp.lt.s32.totalorder %s19, 0
        %s153 = scalar_select %p152, %s19, 0
        %s154 = scalar_lea.vmem %s2, %s153
      $region20: #{bert_sentiment_forward.15} parent=11 // pred_fallthru
        _
    $region12: #{bert_sentiment_forward.15} parent=5 // pred_fallthru
      _
    %p155 = scmp.lt.s32.totalorder %s9, 2
    // Predicated region
    $region21: #{bert_sentiment_forward.15} parent=5 // pred_check
      %p156 = pneg %p155
    $region22: #{bert_sentiment_forward.15} parent=5 // pred_check_branch
      %158 = sbr.rel (%p156) target = $region24
    $region23: #{bert_sentiment_forward.15} parent=5 // pred_region
      // Predicated region
      $region25: #{bert_sentiment_forward.15} parent=23 // pred_check
        %p159 = pneg %p41
      $region26: #{bert_sentiment_forward.15} parent=23 // pred_check_branch
        %161 = sbr.rel (%p159) target = $region28
      $region27: #{bert_sentiment_forward.15} parent=23 // pred_region
        %p162 = scmp.lt.s32.totalorder %s16, 1
        %s163 = scalar_select %p162, %s16, 1
        %s164 = smul.addr %s163, 4
        %s165 = scalar_lea.vmem %s0, %s164
      $region28: #{bert_sentiment_forward.15} parent=23 // pred_fallthru
        _
    $region24: #{bert_sentiment_forward.15} parent=5 // pred_fallthru
      _
    %p166 = scmp.le.s32.totalorder 1, %s9
    %p167 = scmp.lt.s32.totalorder %s9, 3
    %p168 = pnand %p166, %p167
    %p169 = pneg %p168
    // Predicated region
    $region29: #{bert_sentiment_forward.15} parent=5 // pred_check
      _
    $region30: #{bert_sentiment_forward.15} parent=5 // pred_check_branch
      %171 = sbr.rel (%p168) target = $region32
    $region31: #{bert_sentiment_forward.15} parent=5 // pred_region
      %s172 = ssub.s32 %s9, 1
      %p173 = scmp.lt.s32.totalorder %s18, 1
      %s174 = scalar_select %p173, %s18, 1
      %s175 = smul.addr %s174, 4
      %s176 = scalar_lea.vmem %s0, %s175
      %p177 = pneg %p47
      %p178 = pneg %p44
      %p179 = scmp.lt.s32.totalorder %s19, 0
      %s180 = scalar_select %p179, %s19, 0
      %s181 = smul.addr %s180, 4
      %s182 = scalar_lea.vmem %s1, %s181
      %p183 = pneg %p73
      %p184 = pneg %p70
      %p185 = scmp.lt.s32.totalorder %s19, 0
      %s186 = scalar_select %p185, %s19, 0
      %s187 = scalar_lea.vmem %s2, %s186
      %p188 = pneg %p99
      %p189 = pneg %p96
      %p190 = pneg %p127
      %p191 = pneg %p124
      %p192 = scmp.lt.s32.totalorder %s18, 1
      %s193 = scalar_select %p192, %s18, 1
      %p194 = scmp.lt.s32.totalorder %s19, 0
      %s195 = scalar_select %p194, %s19, 0
      %s196 = sadd.s32 %s195, %s193
      %s197 = smul.addr %s196, 4
      %s198 = scalar_lea.vmem %s3, %s197
      %p199 = scmp.lt.s32.totalorder %s18, 1
      %s200 = scalar_select %p199, %s18, 1
      %s201 = smul.addr %s200, 4
      %s202 = scalar_lea.vmem %s0, %s201
      %p203 = scmp.lt.s32.totalorder %s19, 0
      %s204 = scalar_select %p203, %s19, 0
      %s205 = smul.addr %s204, 4
      %s206 = scalar_lea.vmem %s1, %s205
      %p207 = scmp.lt.s32.totalorder %s19, 0
      %s208 = scalar_select %p207, %s19, 0
      %s209 = scalar_lea.vmem %s2, %s208
      %p210 = scmp.lt.s32.totalorder %s18, 1
      %s211 = scalar_select %p210, %s18, 1
      %p212 = scmp.lt.s32.totalorder %s19, 0
      %s213 = scalar_select %p212, %s19, 0
      %s214 = sadd.s32 %s213, %s211
      %s215 = smul.addr %s214, 4
      %s216 = scalar_lea.vmem %s3, %s215
      %v218 = vld [vmem:[%s202] sm:$0xf]
      %v219 = vld [vmem:[%s206] sm:$0xf]
      %v220 = vld [vmem:[%s206 + $0x4] sm:$0xf]
      %v221 = vld [vmem:[%s206 + $0x8] sm:$0xf]
      %v222 = vld [vmem:[%s206 + $0xc] sm:$0xf]
      %v223 = vld [vmem:[%s209] sm:$0x1]
      %v225 = vperm.slane %v223, 0
      %v231 = vunpack.c.l.b16 %v219
      %v232 = vunpack.c.l.b16 %v220
      %v233 = vunpack.c.l.b16 %v221
      %v234 = vunpack.c.l.b16 %v222
      %v235 = vpack.c.b16 %v232, %v231
      %v236 = vpack.c.b16 %v234, %v233
      %vm239 = vcmask 261120
      %v241 = vsel %vm239, %v218, 0
      %243 = vmatpush.bf16.msra.mxu0 0
      %244 = vmatpush.bf16.msra.mxu0 0
      %245 = vmatpush.bf16.msra.mxu0 0
      %246 = vmatpush.bf16.msra.mxu0 0
      %247 = vmatpush.bf16.msra.mxu0 0
      %248 = vmatpush.bf16.msra.mxu0 0
      %249 = vmatpush.bf16.msra.mxu0 %v236
      %250 = vmatpush.bf16.msra.mxu0 %v235
      %251 = vmatmul.bf16.gmra.mxu0 %v241
      %v252 = vpop.f32.mrf.mxu0
      %v253 = vadd.f32 %v225, %v252
      %v254 = vpop.f32.mrf.mxu0
      %255 = vdwg.mxu0
      %v256 = vmul.f32 %v253, 0.5
      %v257 = vmul.f32 %v253, 0.044715
      %v258 = vmul.f32 %v257, %v253
      %v259 = vmul.f32 %v258, %v253
      %v260 = vadd.f32 %v253, %v259
      %v261 = vmul.f32 %v260, 0.7978846
      %v262 = vtanh.pop %v261
      %v263 = vadd.f32 %v262, 1.0
      %v264 = vmul.f32 %v256, %v263
      %v265 = vpack.c.bf16 %v264, %v264
      %vm266 = vcmask 519168
      %267 = vst.msk [vmem:[%s216] sm:$0xf] %vm266, %v265
      %p268 = scmp.lt.s32.totalorder %s18, 1
      %s269 = scalar_select %p268, %s18, 1
      %p270 = scmp.lt.s32.totalorder %s19, 0
      %s271 = scalar_select %p270, %s19, 0
      %s272 = sadd.s32 %s271, %s269
      %s273 = smul.addr %s272, 4
      %s274 = scalar_lea.vmem %s3, %s273
      // Predicated region
      $region33: #{bert_sentiment_forward.15} parent=31 // pred_check
        %p275 = pneg %p124
      $region34: #{bert_sentiment_forward.15} parent=31 // pred_check_branch
        %277 = sbr.rel (%p275) target = $region36
      $region35: #{bert_sentiment_forward.15} parent=31 // pred_region
        _
      $region36: #{bert_sentiment_forward.15} parent=31 // pred_fallthru
        _
    $region32: #{bert_sentiment_forward.15} parent=5 // pred_fallthru
      _
    %p278 = scmp.le.s32.totalorder 2, %s9
    // Predicated region
    $region37: #{bert_sentiment_forward.15} parent=5 // pred_check
      %p279 = pneg %p278
    $region38: #{bert_sentiment_forward.15} parent=5 // pred_check_branch
      %281 = sbr.rel (%p279) target = $region40
    $region39: #{bert_sentiment_forward.15} parent=5 // pred_region
      %s282 = ssub.s32 %s9, 2
      // Predicated region
      $region41: #{bert_sentiment_forward.15} parent=39 // pred_check
        %p283 = pneg %p130
      $region42: #{bert_sentiment_forward.15} parent=39 // pred_check_branch
        %285 = sbr.rel (%p283) target = $region44
      $region43: #{bert_sentiment_forward.15} parent=39 // pred_region
        %p286 = scmp.lt.s32.totalorder %s20, 1
        %s287 = scalar_select %p286, %s20, 1
        %p288 = scmp.lt.s32.totalorder %s21, 0
        %s289 = scalar_select %p288, %s21, 0
        %s290 = sadd.s32 %s289, %s287
        %s291 = smul.addr %s290, 4
        %s292 = scalar_lea.vmem %s3, %s291
      $region44: #{bert_sentiment_forward.15} parent=39 // pred_fallthru
        _
    $region40: #{bert_sentiment_forward.15} parent=5 // pred_fallthru
      _
  $region6: #{bert_sentiment_forward.15} parent=0 // loop_footer
    %s13 = sadd.s32 1, %s9
  $region7: #{bert_sentiment_forward.15} parent=0 // loop_footer_branch
    %8 = sbr.rel target = $region3
  $region8: #{bert_sentiment_forward.15} parent=0 // loop_exit
    _

// kernel: bert_sentiment_forward.16
$region0: #{bert_sentiment_forward.16}
  #allocation0 [shape = 'u32[]', space=smem, size = 0x4, offset = 0x4, fixed_abs, tag = 'smem constant byte address 0x4 - core index']
  #allocation1 [shape = 'u32[72,128]{1,0:T(1,128)}', space=vmem, size = 0x9000, scoped, tag = 'internal scratch']
  %s0 = inlined_call_operand.vmem [shape: bf16[16,64], index: 0, kind: input, shape index: {}]
  %s1 = inlined_call_operand.vmem [shape: bf16[64,32], index: 1, kind: input, shape index: {}]
  %s2 = inlined_call_operand.vmem [shape: f32[1,32], index: 2, kind: input, shape index: {}]
  %s3 = inlined_call_operand.vmem [shape: bf16[16,32], index: 3, kind: input, shape index: {}]
  %s4 = inlined_call_operand.vmem [shape: f32[1,32], index: 4, kind: input, shape index: {}]
  %s5 = inlined_call_operand.vmem [shape: f32[1,32], index: 5, kind: input, shape index: {}]
  %s6 = inlined_call_operand.vmem [shape: bf16[16,32], index: 6, kind: output, shape index: {}]
  %s7 = sld [smem:[#allocation0]]
  $region57: #{bert_sentiment_forward.16} parent=0
    _
  %s9 = ssub.s32 1, %s7
  %s10 = scalar_select 0, %s9, %s7
  loop: start=0, step=1, limit=4
  $region2: #{bert_sentiment_forward.16} parent=0 // loop_pre_header
    _
  $region3: #{bert_sentiment_forward.16} parent=0 // loop_header
    %s12 = sphi 0, %s16
    %p13 = scmp.ge.s32.totalorder %s12, 4
    %s22 = sphi 0, %s24
    %s25 = sphi 0, %s22
    %s26 = sphi 0, %s25
    %s42 = sphi 0, %s26
    %s46 = sphi 0, %s46
    %s48 = sphi 0, %s46
    %s49 = sphi 0, %s48
    %s63 = sphi 0, %s49
    %s67 = sphi 0, %s67
    %s69 = sphi 0, %s67
    %s70 = sphi 0, %s69
    %s84 = sphi 0, %s70
    %s90 = sphi 0, %s92
    %s93 = sphi 0, %s90
    %s94 = sphi 0, %s93
    %s110 = sphi 0, %s94
    %s114 = sphi 0, %s114
    %s116 = sphi 0, %s114
    %s117 = sphi 0, %s116
    %s131 = sphi 0, %s117
    %s135 = sphi 0, %s135
    %s137 = sphi 0, %s135
    %s138 = sphi 0, %s137
    %s152 = sphi 0, %s138
    %s158 = sphi 0, %s160
    %s161 = sphi 0, %s158
    %s162 = sphi 0, %s161
    %s178 = sphi 0, %s162
  $region4: #{bert_sentiment_forward.16} parent=0 // loop_header_branch
    %15 = sbr.rel (%p13) target = $region8
  $region5: #{bert_sentiment_forward.16} parent=0 // loop_body
    %s17 = ssub.s32 %s12, 1
    %s18 = ssub.s32 %s12, 2
    %s19 = sadd.s32 %s12, 1
    %s20 = ssub.s32 %s12, %s19
    %p21 = scmp.eq.s32.totalorder %s20, 0
    %s23 = sadd.s32 %s22, 1
    %s24 = scalar_select %p21, %s22, %s23
    %p27 = pneg %p21
    %p28 = scmp.eq.s32.totalorder %s12, 1
    %p29 = por %p27, %p28
    %p30 = scmp.ne.s32.totalorder %s22, %s25
    %p31 = scmp.eq.s32.totalorder %s12, 0
    %p32 = por %p30, %p31
    %p33 = scmp.ne.s32.totalorder %s22, %s25
    %p34 = scmp.eq.s32.totalorder %s17, 1
    %p35 = por %p33, %p34
    %p36 = scmp.ne.s32.totalorder %s25, %s26
    %p37 = scmp.eq.s32.totalorder %s17, 0
    %p38 = por %p36, %p37
    %p39 = scmp.ne.s32.totalorder %s25, %s26
    %p40 = scmp.eq.s32.totalorder %s18, 1
    %p41 = por %p39, %p40
    %p43 = scmp.ne.s32.totalorder %s26, %s42
    %p44 = scmp.eq.s32.totalorder %s18, 0
    %p45 = por %p43, %p44
    %s47 = sadd.s32 %s46, 1
    %p50 = scmp.eq.s32.totalorder %s12, 1
    %p51 = scmp.ne.s32.totalorder %s46, %s48
    %p52 = scmp.eq.s32.totalorder %s12, 0
    %p53 = por %p51, %p52
    %p54 = scmp.ne.s32.totalorder %s46, %s48
    %p55 = scmp.eq.s32.totalorder %s17, 1
    %p56 = por %p54, %p55
    %p57 = scmp.ne.s32.totalorder %s48, %s49
    %p58 = scmp.eq.s32.totalorder %s17, 0
    %p59 = por %p57, %p58
    %p60 = scmp.ne.s32.totalorder %s48, %s49
    %p61 = scmp.eq.s32.totalorder %s18, 1
    %p62 = por %p60, %p61
    %p64 = scmp.ne.s32.totalorder %s49, %s63
    %p65 = scmp.eq.s32.totalorder %s18, 0
    %p66 = por %p64, %p65
    %s68 = sadd.s32 %s67, 1
    %p71 = scmp.eq.s32.totalorder %s12, 1
    %p72 = scmp.ne.s32.totalorder %s67, %s69
    %p73 = scmp.eq.s32.totalorder %s12, 0
    %p74 = por %p72, %p73
    %p75 = scmp.ne.s32.totalorder %s67, %s69
    %p76 = scmp.eq.s32.totalorder %s17, 1
    %p77 = por %p75, %p76
    %p78 = scmp.ne.s32.totalorder %s69, %s70
    %p79 = scmp.eq.s32.totalorder %s17, 0
    %p80 = por %p78, %p79
    %p81 = scmp.ne.s32.totalorder %s69, %s70
    %p82 = scmp.eq.s32.totalorder %s18, 1
    %p83 = por %p81, %p82
    %p85 = scmp.ne.s32.totalorder %s70, %s84
    %p86 = scmp.eq.s32.totalorder %s18, 0
    %p87 = por %p85, %p86
    %s88 = ssub.s32 %s12, %s19
    %p89 = scmp.eq.s32.totalorder %s88, 0
    %s91 = sadd.s32 %s90, 1
    %s92 = scalar_select %p89, %s90, %s91
    %p95 = pneg %p89
    %p96 = scmp.eq.s32.totalorder %s12, 1
    %p97 = por %p95, %p96
    %p98 = scmp.ne.s32.totalorder %s90, %s93
    %p99 = scmp.eq.s32.totalorder %s12, 0
    %p100 = por %p98, %p99
    %p101 = scmp.ne.s32.totalorder %s90, %s93
    %p102 = scmp.eq.s32.totalorder %s17, 1
    %p103 = por %p101, %p102
    %p104 = scmp.ne.s32.totalorder %s93, %s94
    %p105 = scmp.eq.s32.totalorder %s17, 0
    %p106 = por %p104, %p105
    %p107 = scmp.ne.s32.totalorder %s93, %s94
    %p108 = scmp.eq.s32.totalorder %s18, 1
    %p109 = por %p107, %p108
    %p111 = scmp.ne.s32.totalorder %s94, %s110
    %p112 = scmp.eq.s32.totalorder %s18, 0
    %p113 = por %p111, %p112
    %s115 = sadd.s32 %s114, 1
    %p118 = scmp.eq.s32.totalorder %s12, 1
    %p119 = scmp.ne.s32.totalorder %s114, %s116
    %p120 = scmp.eq.s32.totalorder %s12, 0
    %p121 = por %p119, %p120
    %p122 = scmp.ne.s32.totalorder %s114, %s116
    %p123 = scmp.eq.s32.totalorder %s17, 1
    %p124 = por %p122, %p123
    %p125 = scmp.ne.s32.totalorder %s116, %s117
    %p126 = scmp.eq.s32.totalorder %s17, 0
    %p127 = por %p125, %p126
    %p128 = scmp.ne.s32.totalorder %s116, %s117
    %p129 = scmp.eq.s32.totalorder %s18, 1
    %p130 = por %p128, %p129
    %p132 = scmp.ne.s32.totalorder %s117, %s131
    %p133 = scmp.eq.s32.totalorder %s18, 0
    %p134 = por %p132, %p133
    %s136 = sadd.s32 %s135, 1
    %p139 = scmp.eq.s32.totalorder %s12, 1
    %p140 = scmp.ne.s32.totalorder %s135, %s137
    %p141 = scmp.eq.s32.totalorder %s12, 0
    %p142 = por %p140, %p141
    %p143 = scmp.ne.s32.totalorder %s135, %s137
    %p144 = scmp.eq.s32.totalorder %s17, 1
    %p145 = por %p143, %p144
    %p146 = scmp.ne.s32.totalorder %s137, %s138
    %p147 = scmp.eq.s32.totalorder %s17, 0
    %p148 = por %p146, %p147
    %p149 = scmp.ne.s32.totalorder %s137, %s138
    %p150 = scmp.eq.s32.totalorder %s18, 1
    %p151 = por %p149, %p150
    %p153 = scmp.ne.s32.totalorder %s138, %s152
    %p154 = scmp.eq.s32.totalorder %s18, 0
    %p155 = por %p153, %p154
    %s156 = ssub.s32 %s12, %s19
    %p157 = scmp.eq.s32.totalorder %s156, 0
    %s159 = sadd.s32 %s158, 1
    %s160 = scalar_select %p157, %s158, %s159
    %p163 = pneg %p157
    %p164 = scmp.eq.s32.totalorder %s12, 1
    %p165 = por %p163, %p164
    %p166 = scmp.ne.s32.totalorder %s158, %s161
    %p167 = scmp.eq.s32.totalorder %s12, 0
    %p168 = por %p166, %p167
    %p169 = scmp.ne.s32.totalorder %s158, %s161
    %p170 = scmp.eq.s32.totalorder %s17, 1
    %p171 = por %p169, %p170
    %p172 = scmp.ne.s32.totalorder %s161, %s162
    %p173 = scmp.eq.s32.totalorder %s17, 0
    %p174 = por %p172, %p173
    %p175 = scmp.ne.s32.totalorder %s161, %s162
    %p176 = scmp.eq.s32.totalorder %s18, 1
    %p177 = por %p175, %p176
    %p179 = scmp.ne.s32.totalorder %s162, %s178
    %p180 = scmp.eq.s32.totalorder %s18, 0
    %p181 = por %p179, %p180
    %p182 = scmp.le.s32.totalorder 1, %s12
    %p183 = scmp.lt.s32.totalorder %s12, 3
    %p184 = pnand %p182, %p183
    %p185 = pneg %p184
    // Predicated region
    $region9: #{bert_sentiment_forward.16} parent=5 // pred_check
      _
    $region10: #{bert_sentiment_forward.16} parent=5 // pred_check_branch
      %187 = sbr.rel (%p184) target = $region12
    $region11: #{bert_sentiment_forward.16} parent=5 // pred_region
      %s188 = ssub.s32 %s12, 1
      // Predicated region
      $region13: #{bert_sentiment_forward.16} parent=11 // pred_check
        %p189 = pneg %p59
      $region14: #{bert_sentiment_forward.16} parent=11 // pred_check_branch
        %191 = sbr.rel (%p189) target = $region16
      $region15: #{bert_sentiment_forward.16} parent=11 // pred_region
        _
      $region16: #{bert_sentiment_forward.16} parent=11 // pred_fallthru
        _
      // Predicated region
      $region17: #{bert_sentiment_forward.16} parent=11 // pred_check
        %p192 = pneg %p80
      $region18: #{bert_sentiment_forward.16} parent=11 // pred_check_branch
        %194 = sbr.rel (%p192) target = $region20
      $region19: #{bert_sentiment_forward.16} parent=11 // pred_region
        _
      $region20: #{bert_sentiment_forward.16} parent=11 // pred_fallthru
        _
      // Predicated region
      $region21: #{bert_sentiment_forward.16} parent=11 // pred_check
        %p195 = pneg %p127
      $region22: #{bert_sentiment_forward.16} parent=11 // pred_check_branch
        %197 = sbr.rel (%p195) target = $region24
      $region23: #{bert_sentiment_forward.16} parent=11 // pred_region
        _
      $region24: #{bert_sentiment_forward.16} parent=11 // pred_fallthru
        _
      // Predicated region
      $region25: #{bert_sentiment_forward.16} parent=11 // pred_check
        %p198 = pneg %p148
      $region26: #{bert_sentiment_forward.16} parent=11 // pred_check_branch
        %200 = sbr.rel (%p198) target = $region28
      $region27: #{bert_sentiment_forward.16} parent=11 // pred_region
        _
      $region28: #{bert_sentiment_forward.16} parent=11 // pred_fallthru
        _
    $region12: #{bert_sentiment_forward.16} parent=5 // pred_fallthru
      _
    %p201 = scmp.lt.s32.totalorder %s12, 2
    // Predicated region
    $region29: #{bert_sentiment_forward.16} parent=5 // pred_check
      %p202 = pneg %p201
    $region30: #{bert_sentiment_forward.16} parent=5 // pred_check_branch
      %204 = sbr.rel (%p202) target = $region32
    $region31: #{bert_sentiment_forward.16} parent=5 // pred_region
      // Predicated region
      $region33: #{bert_sentiment_forward.16} parent=31 // pred_check
        %p205 = pneg %p32
      $region34: #{bert_sentiment_forward.16} parent=31 // pred_check_branch
        %207 = sbr.rel (%p205) target = $region36
      $region35: #{bert_sentiment_forward.16} parent=31 // pred_region
        %p208 = scmp.lt.s32.totalorder %s12, 1
        %s209 = scalar_select %p208, %s12, 1
        %s210 = smul.addr %s209, 4
        %s211 = scalar_lea.vmem %s0, %s210
      $region36: #{bert_sentiment_forward.16} parent=31 // pred_fallthru
        _
      // Predicated region
      $region37: #{bert_sentiment_forward.16} parent=31 // pred_check
        %p212 = pneg %p100
      $region38: #{bert_sentiment_forward.16} parent=31 // pred_check_branch
        %214 = sbr.rel (%p212) target = $region40
      $region39: #{bert_sentiment_forward.16} parent=31 // pred_region
        %p215 = scmp.lt.s32.totalorder %s12, 1
        %s216 = scalar_select %p215, %s12, 1
        %s217 = smul.addr %s216, 4
        %s218 = scalar_lea.vmem %s3, %s217
      $region40: #{bert_sentiment_forward.16} parent=31 // pred_fallthru
        _
    $region32: #{bert_sentiment_forward.16} parent=5 // pred_fallthru
      _
    %p219 = scmp.le.s32.totalorder 1, %s12
    %p220 = scmp.lt.s32.totalorder %s12, 3
    %p221 = pnand %p219, %p220
    %p222 = pneg %p221
    // Predicated region
    $region41: #{bert_sentiment_forward.16} parent=5 // pred_check
      _
    $region42: #{bert_sentiment_forward.16} parent=5 // pred_check_branch
      %224 = sbr.rel (%p221) target = $region44
    $region43: #{bert_sentiment_forward.16} parent=5 // pred_region
      %s225 = ssub.s32 %s12, 1
      %p226 = scmp.lt.s32.totalorder %s17, 1
      %s227 = scalar_select %p226, %s17, 1
      %s228 = smul.addr %s227, 4
      %s229 = scalar_lea.vmem %s0, %s228
      %p230 = pneg %p38
      %p231 = pneg %p35
      %p232 = pneg %p59
      %p233 = pneg %p56
      %p234 = pneg %p80
      %p235 = pneg %p77
      %p236 = scmp.lt.s32.totalorder %s17, 1
      %s237 = scalar_select %p236, %s17, 1
      %s238 = smul.addr %s237, 4
      %s239 = scalar_lea.vmem %s3, %s238
      %p240 = pneg %p106
      %p241 = pneg %p103
      %p242 = pneg %p127
      %p243 = pneg %p124
      %p244 = pneg %p148
      %p245 = pneg %p145
      %p246 = pneg %p174
      %p247 = pneg %p171
      %p248 = scmp.lt.s32.totalorder %s17, 1
      %s249 = scalar_select %p248, %s17, 1
      %s250 = smul.addr %s249, 4
      %s251 = scalar_lea.vmem %s6, %s250
      %p252 = scmp.lt.s32.totalorder %s17, 1
      %s253 = scalar_select %p252, %s17, 1
      %s254 = smul.addr %s253, 4
      %s255 = scalar_lea.vmem %s0, %s254
      %p256 = scmp.lt.s32.totalorder %s17, 1
      %s257 = scalar_select %p256, %s17, 1
      %s258 = smul.addr %s257, 4
      %s259 = scalar_lea.vmem %s3, %s258
      %p260 = scmp.lt.s32.totalorder %s17, 1
      %s261 = scalar_select %p260, %s17, 1
      %s262 = smul.addr %s261, 4
      %s263 = scalar_lea.vmem %s6, %s262
      %v265 = vld [vmem:[%s255] sm:$0xf]
      %v266 = vld [vmem:[%s1] sm:$0xf]
      %v267 = vld [vmem:[%s1 + $0x4] sm:$0xf]
      %v268 = vld [vmem:[%s1 + $0x8] sm:$0xf]
      %v269 = vld [vmem:[%s1 + $0xc] sm:$0xf]
      %v270 = vld [vmem:[%s1 + $0x10] sm:$0xf]
      %v271 = vld [vmem:[%s1 + $0x14] sm:$0xf]
      %v272 = vld [vmem:[%s1 + $0x18] sm:$0xf]
      %v273 = vld [vmem:[%s1 + $0x1c] sm:$0xf]
      %v274 = vld [vmem:[%s2] sm:$0x1]
      %v276 = vperm.slane %v274, 0
      %v286 = vunpack.c.l.b16 %v266
      %v287 = vunpack.c.l.b16 %v267
      %v288 = vunpack.c.l.b16 %v268
      %v289 = vunpack.c.l.b16 %v269
      %v290 = vunpack.c.l.b16 %v270
      %v291 = vunpack.c.l.b16 %v271
      %v292 = vunpack.c.l.b16 %v272
      %v293 = vunpack.c.l.b16 %v273
      %v294 = vpack.c.b16 %v287, %v286
      %v295 = vpack.c.b16 %v289, %v288
      %v296 = vpack.c.b16 %v291, %v290
      %v297 = vpack.c.b16 %v293, %v292
      %vm302 = vcmask 523264
      %v304 = vsel %vm302, %v265, 0
      %306 = vmatpush.bf16.msra.mxu0 0
      %307 = vmatpush.bf16.msra.mxu0 0
      %308 = vmatpush.bf16.msra.mxu0 0
      %309 = vmatpush.bf16.msra.mxu0 0
      %310 = vmatpush.bf16.msra.mxu0 %v297
      %311 = vmatpush.bf16.msra.mxu0 %v296
      %312 = vmatpush.bf16.msra.mxu0 %v295
      %313 = vmatpush.bf16.msra.mxu0 %v294
      %314 = vmatmul.bf16.gmra.mxu0 %v304
      %v315 = vpop.f32.mrf.mxu0
      %v316 = vadd.f32 %v276, %v315
      %v317 = vpop.f32.mrf.mxu0
      %318 = vdwg.mxu0
      %v319 = vld [vmem:[%s259] sm:$0xf]
      %v320 = vunpack.c.l.bf16 %v319
      %v321 = vadd.f32 %v316, %v320
      %v322 = vld [vmem:[%s4] sm:$0x1]
      %v323 = vld [vmem:[%s5] sm:$0x1]
      %vm324 = vcmask 261120
      %v325 = vsel %vm324, %v321, 0.0
      %326 = vadd.xlane.f32.xlu0 %v325
      %v327 = vpop.xlane.xlu0 %326
      %v328 = vrcp.pop 32.0
      %v329 = vmul.f32 32.0, %v328
      %v330 = vsub.f32 1.0, %v329
      %v331 = vmul.f32 %v328, %v330
      %v332 = vadd.f32 %v328, %v331
      %vm333 = vweird.f32 %v328
      %v334 = vsel %vm333, %v328, %v332
      %v335 = vmul.f32 %v327, %v334
      %v336 = vsub.f32 %v321, %v335
      %v337 = vmul.f32 %v336, %v336
      %v338 = vsel %vm324, %v337, 0.0
      %339 = vadd.xlane.f32.xlu0 %v338
      %v340 = vpop.xlane.xlu0 %339
      %v341 = vmul.f32 %v340, %v334
      %v342 = vadd.f32 %v341, 1e-12
      %v343 = vrsqrt.pop %v342
      %v344 = vmul.f32 %v343, %v342
      %v345 = vmul.f32 %v344, %v343
      %v346 = vmul.f32 0.5, %v345
      %v347 = vsub.f32 1.5, %v346
      %v348 = vmul.f32 %v343, %v347
      %vm349 = vweird.f32 %v342
      %vm350 = vweird.f32 %v343
      %vm351 = vmor %vm349, %vm350
      %v352 = vsel %vm351, %v343, %v348
      %v353 = vmul.f32 %v336, %v352
      %v355 = vperm.slane %v322, 0
      %v357 = vmul.f32 %v353, %v355
      %v359 = vperm.slane %v323, 0
      %v361 = vadd.f32 %v357, %v359
      %v362 = vpack.c.bf16 %v361, %v361
      %vm363 = vcmask 257024
      %364 = vst.msk [vmem:[%s263] sm:$0xf] %vm363, %v362
      %p365 = scmp.lt.s32.totalorder %s17, 1
      %s366 = scalar_select %p365, %s17, 1
      %s367 = smul.addr %s366, 4
      %s368 = scalar_lea.vmem %s6, %s367
      // Predicated region
      $region45: #{bert_sentiment_forward.16} parent=43 // pred_check
        %p369 = pneg %p171
      $region46: #{bert_sentiment_forward.16} parent=43 // pred_check_branch
        %371 = sbr.rel (%p369) target = $region48
      $region47: #{bert_sentiment_forward.16} parent=43 // pred_region
        _
      $region48: #{bert_sentiment_forward.16} parent=43 // pred_fallthru
        _
    $region44: #{bert_sentiment_forward.16} parent=5 // pred_fallthru
      _
    %p372 = scmp.le.s32.totalorder 2, %s12
    // Predicated region
    $region49: #{bert_sentiment_forward.16} parent=5 // pred_check
      %p373 = pneg %p372
    $region50: #{bert_sentiment_forward.16} parent=5 // pred_check_branch
      %375 = sbr.rel (%p373) target = $region52
    $region51: #{bert_sentiment_forward.16} parent=5 // pred_region
      %s376 = ssub.s32 %s12, 2
      // Predicated region
      $region53: #{bert_sentiment_forward.16} parent=51 // pred_check
        %p377 = pneg %p177
      $region54: #{bert_sentiment_forward.16} parent=51 // pred_check_branch
        %379 = sbr.rel (%p377) target = $region56
      $region55: #{bert_sentiment_forward.16} parent=51 // pred_region
        %p380 = scmp.lt.s32.totalorder %s18, 1
        %s381 = scalar_select %p380, %s18, 1
        %s382 = smul.addr %s381, 4
        %s383 = scalar_lea.vmem %s6, %s382
      $region56: #{bert_sentiment_forward.16} parent=51 // pred_fallthru
        _
    $region52: #{bert_sentiment_forward.16} parent=5 // pred_fallthru
      _
  $region6: #{bert_sentiment_forward.16} parent=0 // loop_footer
    %s16 = sadd.s32 1, %s12
  $region7: #{bert_sentiment_forward.16} parent=0 // loop_footer_branch
    %11 = sbr.rel target = $region3
  $region8: #{bert_sentiment_forward.16} parent=0 // loop_exit
    _

</llo_original>
